<compile_context>
chip_gen: v7x
topology: tpu7x:2x2x1
jax: 0.10.0
libtpu: 0.0.40
codegen_flags: <defaults>
</compile_context>

<pallas_src>
import jax
import jax.numpy as jnp
import numpy as np
from jax.experimental import pallas as pl
from jax.experimental.pallas import tpu as pltpu

_DEFAULT_ROW_TILE = 4096          # perf review: 2048-8192; multiple of 128
_SMALL_K = 8                      # contractions up to this size use VPU FMAs
_RESIDENT_SINGLE_BUFFER_BYTES = 4 << 20   # Buffered(1) only when residents are big


def _round_up(x, m):
    return ((x + m - 1) // m) * m


def _num_tensorcores_per_chip():
    """v7x has 2 TensorCores per chip; v5e/v6e have 1.  Heuristic, safe fallback."""
    try:
        kind = jax.devices()[0].device_kind.lower()
    except Exception:
        return 1
    return 2 if ("v7" in kind or "7x" in kind) else 1


def _pick_row_tile(n_rows, requested, n_cores):
    """Multiple of 128; largest single tile on 1-TC chips, >=2 steps/core on v7x."""
    requested = max(128, (int(requested) // 128) * 128)
    tile = min(requested, _round_up(n_rows, 128))          # never larger than the problem
    if n_cores > 1:
        per_step = _round_up(pl.cdiv(n_rows, 2 * n_cores), 128)
        tile = min(tile, max(128, per_step))
    return tile


def _dimension_semantics(n_cores, n_steps):
    if n_cores > 1 and n_steps >= n_cores:
        return (pltpu.CORE_PARALLEL,)     # v7x: shard row tiles across both TCs
    return ("parallel",)


def _vmem_limit_bytes(d_in, weights, biases, tile):
    """Explicit scoped-VMEM budget with headroom; stays inside v7x's 64 MiB."""
    feat = [d_in] + [int(w.shape[0]) for w in weights]
    io_blocks = 4 * tile * (feat[0] + feat[-1]) * 2                     # in/out, double-buffered
    residents = 2 * sum(4 * (w.size + b.size) for w, b in zip(weights, biases))
    temps = 6 * 4 * tile * max(feat)                                    # h + sin temporaries
    est = int(io_blocks + residents + temps + (4 << 20))
    return int(min(max(est, 32 << 20), 56 << 20))


def _make_mlp_kernel(num_layers, apply_sin, small_k):
    """Kernel for one row tile: refs = (x, w0, b0, ..., w_{L-1}, b_{L-1}, out).

    Weights are (d_out, d_in) (PyTorch nn.Linear layout) with omega pre-folded;
    biases are (d_out, 1).  Activations flow lane-dense as (features, rows).
    All W/b are pre-cast to f32 in the wrapper -> no per-step casts here.
    """
    apply_sin = tuple(bool(s) for s in apply_sin)

    def kernel(*refs):
        x_ref = refs[0]
        out_ref = refs[-1]
        wb_refs = refs[1:-1]

        h = x_ref[...]                                      # (d_in, rows), f32
        for li in range(num_layers):
            w = wb_refs[2 * li][...]                        # (d_out, d_in)
            b = wb_refs[2 * li + 1][...]                    # (d_out, 1)
            d_in = w.shape[1]
            if d_in <= small_k:
                # Lane-dense VPU FMAs (outer-product accumulate over tiny K);
                # a K=2 contraction would waste the MXU systolic array.
                acc = w[:, 0:1] * h[0:1, :]
                for k in range(1, d_in):
                    acc = acc + w[:, k:k + 1] * h[k:k + 1, :]
                h = acc + b
            else:
                h = jnp.dot(w, h, preferred_element_type=jnp.float32) + b
            if apply_sin[li]:
                h = jnp.sin(h)                              # omega already folded into w, b
        out_ref[...] = h.astype(out_ref.dtype)

    return kernel


def mlp_forward_transposed(coords_t, weights, biases, apply_sin, *,
                           row_tile=_DEFAULT_ROW_TILE, small_k=_SMALL_K):
    """Stack of (optionally sine-activated) affine layers, lane-dense layout.

    coords_t:   (d_in, N) f32, rows on the 128-lane axis.
    weights[i]: (d_out_i, d_in_i) PyTorch layout, omega already folded in.
    biases[i]:  (d_out_i,) or (d_out_i, 1), omega already folded in.
    Returns (d_out_last, N).
    """
    coords_t = jnp.asarray(coords_t, jnp.float32)
    # Hoist dtype normalization out of the kernel (grid-invariant data).
    weights = [jnp.asarray(w, jnp.float32) for w in weights]
    biases = [jnp.asarray(b, jnp.float32).reshape(-1, 1) for b in biases]

    d_in, n_rows = coords_t.shape
    num_layers = len(weights)
    out_features = int(weights[-1].shape[0])

    n_cores = _num_tensorcores_per_chip()
    tile = _pick_row_tile(n_rows, row_tile, n_cores)
    grid = (pl.cdiv(n_rows, tile),)       # ragged last block handled by Pallas

    kernel = _make_mlp_kernel(num_layers, apply_sin, small_k)

    resident_bytes = sum(4 * (w.size + b.size) for w, b in zip(weights, biases))
    resident_mode = (pl.Buffered(1)
                     if resident_bytes > _RESIDENT_SINGLE_BUFFER_BYTES else None)

    in_specs = [pl.BlockSpec((d_in, tile), lambda i: (0, i))]
    for w, b in zip(weights, biases):
        # Grid-invariant residents (constant block index across the grid).
        if resident_mode is not None:
            in_specs.append(pl.BlockSpec(w.shape, lambda i: (0, 0),
                                         pipeline_mode=resident_mode))
            in_specs.append(pl.BlockSpec(b.shape, lambda i: (0, 0),
                                         pipeline_mode=resident_mode))
        else:
            in_specs.append(pl.BlockSpec(w.shape, lambda i: (0, 0)))
            in_specs.append(pl.BlockSpec(b.shape, lambda i: (0, 0)))
    out_spec = pl.BlockSpec((out_features, tile), lambda i: (0, i))

    out_t = pl.pallas_call(
        kernel,
        out_shape=jax.ShapeDtypeStruct((out_features, n_rows), coords_t.dtype),
        grid_spec=pltpu.PrefetchScalarGridSpec(
            num_scalar_prefetch=0,
            grid=grid,
            in_specs=in_specs,
            out_specs=out_spec,
        ),
        compiler_params=pltpu.CompilerParams(
            dimension_semantics=_dimension_semantics(n_cores, grid[0]),
            vmem_limit_bytes=_vmem_limit_bytes(d_in, weights, biases, tile),
        ),
    )(coords_t, *[a for wb in zip(weights, biases) for a in wb])

    return out_t


def sine_layer_forward_pallas(x, weight, bias, omega_0, *,
                              row_tile=_DEFAULT_ROW_TILE, transposed_output=False):
    """PyTorch SineLayer.forward: sin(omega_0 * (x @ W.T + b)).

    x: (N, in_features); weight: (out_features, in_features); bias: (out_features,)
    transposed_output=False -> (N, out_features)  (PyTorch-compatible; pays one
                               XLA transpose of the output).
    transposed_output=True  -> (out_features, N)  lane-dense, no extra HBM pass.
    """
    w_f = omega_0 * jnp.asarray(weight, jnp.float32)            # fold omega once
    b_f = (omega_0 * jnp.asarray(bias, jnp.float32)).reshape(-1, 1)
    out_t = mlp_forward_transposed(jnp.asarray(x, jnp.float32).T,
                                   [w_f], [b_f], [True], row_tile=row_tile)
    if transposed_output:
        return out_t
    return out_t.T


def siren_forward_pallas(coords, weights, biases, apply_sin, *, width, height,
                         row_tile=_DEFAULT_ROW_TILE):
    """Full SIREN: coords (N, 2) -> NCHW (1, out_features, width, height).

    Lane-dense (out, N) kernel output reshapes straight to NCHW — no transpose.
    """
    out_features = int(weights[-1].shape[0])
    out_t = mlp_forward_transposed(jnp.asarray(coords, jnp.float32).T,
                                   weights, biases, apply_sin, row_tile=row_tile)
    return out_t.reshape(1, out_features, width, height)


def init_siren_params(key, in_features, hidden_features, hidden_layers,
                      out_features, first_omega_0=30.0, hidden_omega_0=30.0):
    """Mirrors the PyTorch SIREN init; omega is folded into sine-layer W/b."""
    dims = ([in_features] + [hidden_features] * (hidden_layers + 1)
            + [out_features])
    num_layers = hidden_layers + 2  # first sine + hidden sines + final linear
    keys = jax.random.split(key, 2 * num_layers)
    weights, biases, apply_sin = [], [], []
    for li in range(num_layers):
        d_in, d_out = dims[li], dims[li + 1]
        is_first = (li == 0)
        is_last = (li == num_layers - 1)
        if is_first:
            w_lim = 1.0 / d_in
        else:
            w_lim = float(np.sqrt(6.0 / d_in) / hidden_omega_0)
        b_lim = 1.0 / float(np.sqrt(d_in))  # nn.Linear default bias init
        w = jax.random.uniform(keys[2 * li], (d_out, d_in), jnp.float32,
                               minval=-w_lim, maxval=w_lim)
        b = jax.random.uniform(keys[2 * li + 1], (d_out, 1), jnp.float32,
                               minval=-b_lim, maxval=b_lim)
        if is_last:
            omega = 1.0                      # outermost linear: no sine
            apply_sin.append(False)
        else:
            omega = float(first_omega_0 if is_first else hidden_omega_0)
            apply_sin.append(True)
        weights.append(omega * w)
        biases.append(omega * b)
    return weights, biases, apply_sin


def sine_layer_reference(x, weight, bias, omega_0):
    """Pure-JAX reference of the spec module (un-folded omega)."""
    return jnp.sin(omega_0 * (x @ weight.T + bias[None, :]))


def mlp_reference(coords_t, weights, biases, apply_sin):
    """Pure-JAX reference of the stacked layers (folded params)."""
    h = coords_t.astype(jnp.float32)
    for w, b, s in zip(weights, biases, apply_sin):
        h = w @ h + jnp.asarray(b, jnp.float32).reshape(-1, 1)
        if s:
            h = jnp.sin(h)
    return h


if __name__ == "__main__":
    key = jax.random.PRNGKey(0)
    k_w, k_b, k_x, k_siren = jax.random.split(key, 4)

    # ---- Test 1: single SineLayer exactly as in the spec --------------------
    in_features, out_features, omega_0 = 2, 32, 30.0
    n_points = 512
    w_lim = 1.0 / in_features                      # is_first=True init
    weight = jax.random.uniform(k_w, (out_features, in_features), jnp.float32,
                                minval=-w_lim, maxval=w_lim)
    b_lim = 1.0 / float(np.sqrt(in_features))      # nn.Linear default bias init
    bias = jax.random.uniform(k_b, (out_features,), jnp.float32,
                              minval=-b_lim, maxval=b_lim)
    x = jax.random.uniform(k_x, (n_points, in_features), jnp.float32,
                           minval=-1.0, maxval=1.0)

    ref = sine_layer_reference(x, weight, bias, omega_0)

    out = sine_layer_forward_pallas(x, weight, bias, omega_0)
    out = jax.block_until_ready(out)
    assert out.shape == (n_points, out_features), out.shape
    np.testing.assert_allclose(np.asarray(out), np.asarray(ref),
                               rtol=1e-4, atol=1e-4)

    # Lane-dense output path (no wrapper transpose) matches the same reference.
    out_t = sine_layer_forward_pallas(x, weight, bias, omega_0,
                                      transposed_output=True)
    out_t = jax.block_until_ready(out_t)
    assert out_t.shape == (out_features, n_points), out_t.shape
    np.testing.assert_allclose(np.asarray(out_t), np.asarray(ref).T,
                               rtol=1e-4, atol=1e-4)

    # ---- Test 2: stacked SineLayers + final linear (SIREN image net) --------
    width, height = 16, 16
    weights, biases, apply_sin = init_siren_params(
        k_siren, in_features=2, hidden_features=32, hidden_layers=2,
        out_features=3, first_omega_0=30.0, hidden_omega_0=30.0)
    coords = jax.random.uniform(jax.random.PRNGKey(1),
                                (width * height, 2), jnp.float32,
                                minval=-1.0, maxval=1.0)
    img = siren_forward_pallas(coords, weights, biases, apply_sin,
                               width=width, height=height)
    img = jax.block_until_ready(img)
    assert img.shape == (1, 3, width, height), img.shape
    ref_img = mlp_reference(coords.T, weights, biases,
                            apply_sin).reshape(1, 3, width, height)
    np.testing.assert_allclose(np.asarray(img), np.asarray(ref_img),
                               rtol=1e-4, atol=1e-4)

    print("KERNEL_OK")
</pallas_src>

<mosaic_0001>
module attributes {stable_mosaic.version = 11 : i64} {
  func.func @kernel(%arg0: i32, %arg1: memref<2x512xf32, #tpu.memory_space<vmem>>, %arg2: memref<32x2xf32, #tpu.memory_space<vmem>>, %arg3: memref<32x1xf32, #tpu.memory_space<vmem>>, %arg4: memref<32x512xf32, #tpu.memory_space<vmem>>) attributes {dimension_semantics = [#tpu.dimension_semantics<parallel>], iteration_bounds = array<i64: 1>, scalar_prefetch = 0 : i64, scratch_operands = 0 : i64, tpu.core_type = #tpu.core_type<tc>, window_params = [{transform_indices = @transform_0, window_bounds = array<i64: 2, 512>}, {pipeline_mode = #tpu.pipeline_mode<synchronous>, transform_indices = @transform_1, window_bounds = array<i64: 32, 2>}, {pipeline_mode = #tpu.pipeline_mode<synchronous>, transform_indices = @transform_2, window_bounds = array<i64: 32, 1>}, {transform_indices = @transform_3, window_bounds = array<i64: 32, 512>}]} {
    %c0 = arith.constant 0 : index
    %c0_0 = arith.constant 0 : index
    %0 = vector.load %arg1[%c0, %c0_0] : memref<2x512xf32, #tpu.memory_space<vmem>>, vector<2x512xf32>
    %c0_1 = arith.constant 0 : index
    %c0_2 = arith.constant 0 : index
    %1 = vector.load %arg2[%c0_1, %c0_2] : memref<32x2xf32, #tpu.memory_space<vmem>>, vector<32x2xf32>
    %c0_3 = arith.constant 0 : index
    %c0_4 = arith.constant 0 : index
    %2 = vector.load %arg3[%c0_3, %c0_4] : memref<32x1xf32, #tpu.memory_space<vmem>>, vector<32x1xf32>
    %3 = vector.extract_strided_slice %1 {offsets = [0, 0], sizes = [32, 1], strides = [1, 1]} : vector<32x2xf32> to vector<32x1xf32>
    %4 = vector.extract_strided_slice %0 {offsets = [0, 0], sizes = [1, 512], strides = [1, 1]} : vector<2x512xf32> to vector<1x512xf32>
    %5 = vector.broadcast %3 : vector<32x1xf32> to vector<32x512xf32>
    %6 = vector.broadcast %4 : vector<1x512xf32> to vector<32x512xf32>
    %7 = arith.mulf %5, %6 : vector<32x512xf32>
    %8 = vector.extract_strided_slice %1 {offsets = [0, 1], sizes = [32, 1], strides = [1, 1]} : vector<32x2xf32> to vector<32x1xf32>
    %9 = vector.extract_strided_slice %0 {offsets = [1, 0], sizes = [1, 512], strides = [1, 1]} : vector<2x512xf32> to vector<1x512xf32>
    %10 = vector.broadcast %8 : vector<32x1xf32> to vector<32x512xf32>
    %11 = vector.broadcast %9 : vector<1x512xf32> to vector<32x512xf32>
    %12 = arith.mulf %10, %11 : vector<32x512xf32>
    %13 = arith.addf %7, %12 : vector<32x512xf32>
    %14 = vector.broadcast %2 : vector<32x1xf32> to vector<32x512xf32>
    %15 = arith.addf %13, %14 : vector<32x512xf32>
    %16 = math.sin %15 : vector<32x512xf32>
    %c0_5 = arith.constant 0 : index
    %c0_6 = arith.constant 0 : index
    %17 = vector.load %arg4[%c0_5, %c0_6] : memref<32x512xf32, #tpu.memory_space<vmem>>, vector<32x512xf32>
    tpu.vector_store %arg4[%c0_5, %c0_6], %16 {strides = array<i32>} : memref<32x512xf32, #tpu.memory_space<vmem>>, vector<32x512xf32>,
    return
  }
  func.func @transform_0(%arg0: i32) -> (i32, i32) {
    %c0_i32 = arith.constant 0 : i32
    %c0_i32_0 = arith.constant 0 : i32
    return %c0_i32, %arg0 : i32, i32
  }
  func.func @transform_1(%arg0: i32) -> (i32, i32) {
    %c0_i32 = arith.constant 0 : i32
    %c0_i32_0 = arith.constant 0 : i32
    %c0_i32_1 = arith.constant 0 : i32
    return %c0_i32, %c0_i32_0 : i32, i32
  }
  func.func @transform_2(%arg0: i32) -> (i32, i32) {
    %c0_i32 = arith.constant 0 : i32
    %c0_i32_0 = arith.constant 0 : i32
    %c0_i32_1 = arith.constant 0 : i32
    return %c0_i32, %c0_i32_0 : i32, i32
  }
  func.func @transform_3(%arg0: i32) -> (i32, i32) {
    %c0_i32 = arith.constant 0 : i32
    %c0_i32_0 = arith.constant 0 : i32
    return %c0_i32, %arg0 : i32, i32
  }
}

</mosaic_0001>

<llo_original>
// kernel: tpu_custom_call.1
$region0: #{tpu_custom_call.1}
  #allocation0 [shape = 'u32[]', space=smem, size = 0x4, offset = 0x4, fixed_abs, tag = 'smem constant byte address 0x4 - core index']
  #allocation1 [shape = 'u32[144,128]{1,0:T(1,128)}', space=vmem, size = 0x12000, scoped, tag = 'internal scratch']
  %s0 = inlined_call_operand.vmem [shape: f32[2,512], index: 0, kind: input, shape index: {}]
  %s1 = inlined_call_operand.vmem [shape: f32[32,2], index: 1, kind: input, shape index: {}]
  %s2 = inlined_call_operand.vmem [shape: f32[32,1], index: 2, kind: input, shape index: {}]
  %s3 = inlined_call_operand.hbm [shape: f32[32,512], index: 3, kind: output, shape index: {}]
  %s4 = sld [smem:[#allocation0]]
  $region22: #{tpu_custom_call.1} parent=0
    _
  %s6 = ssub.s32 1, %s4
  %s7 = scalar_select 0, %s6, %s4
  $region1: #{tpu_custom_call.1} parent=0
    #allocation2 [shape = 'u8[65536]{0}', space=vmem, size = 0x10000, scoped, tag = 'output window, operand 0, single buffered']
    #allocation3 [shape = 's32[1]{0}', space=sflag, size = 0x4, scoped, tag = 'scoped memory for tpu_custom_call.1']
    %8 = vsyncpa [#allocation3], 0
    // Predicated region
    $region2: #{tpu_custom_call.1} parent=1 // pred_check
      _
    $region3: #{tpu_custom_call.1} parent=1 // pred_check_branch
      %10 = sbr.rel (0) target = $region5
    $region4: #{tpu_custom_call.1} parent=1 // pred_region
      _
    $region5: #{tpu_custom_call.1} parent=1 // pred_fallthru
      _
    // Predicated region
    $region6: #{tpu_custom_call.1} parent=1 // pred_check
      _
    $region7: #{tpu_custom_call.1} parent=1 // pred_check_branch
      %12 = sbr.rel (0) target = $region9
    $region8: #{tpu_custom_call.1} parent=1 // pred_region
      _
    $region9: #{tpu_custom_call.1} parent=1 // pred_fallthru
      _
    // Predicated region
    $region10: #{tpu_custom_call.1} parent=1 // pred_check
      _
    $region11: #{tpu_custom_call.1} parent=1 // pred_check_branch
      %14 = sbr.rel (0) target = $region13
    $region12: #{tpu_custom_call.1} parent=1 // pred_region
      _
    $region13: #{tpu_custom_call.1} parent=1 // pred_fallthru
      _
    %v15 = vld [vmem:[%s0] sm:$0xff]
    %v16 = vld [vmem:[%s1] sm:$0xff]
    %v17 = vld [vmem:[%s1 + $0x8] sm:$0xff]
    %v18 = vld [vmem:[%s1 + $0x10] sm:$0xff]
    %v19 = vld [vmem:[%s1 + $0x18] sm:$0xff]
    %v20 = vld [vmem:[%s2] sm:$0xff]
    %v21 = vld [vmem:[%s2 + $0x8] sm:$0xff]
    %v22 = vld [vmem:[%s2 + $0x10] sm:$0xff]
    %v23 = vld [vmem:[%s2 + $0x18] sm:$0xff]
    %25 = vset.pattern.permute.xlu0 0
    %26 = vperm.xlu0 %25, %v16
    %v27 = vpop.permute.xlu0 %26
    %30 = vset.pattern.permute.xlu0 0
    %31 = vperm.xlu0 %30, %v17
    %v32 = vpop.permute.xlu0 %31
    %35 = vset.pattern.permute.xlu0 0
    %36 = vperm.xlu0 %35, %v18
    %v37 = vpop.permute.xlu0 %36
    %40 = vset.pattern.permute.xlu0 0
    %41 = vperm.xlu0 %40, %v19
    %v42 = vpop.permute.xlu0 %41
    %v45 = vlaneseq
    %v46 = vshrl.u32 %v45, 7
    %v47 = vsub.s32 0, %v46
    %v48 = vrot.slane %v15, %v47
    %v49 = vlaneseq
    %v50 = vshrl.u32 %v49, 7
    %v51 = vsub.s32 2, %v50
    %v52 = vrot.slane %v15, %v51
    %v53 = vlaneseq
    %v54 = vshrl.u32 %v53, 7
    %v55 = vsub.s32 4, %v54
    %v56 = vrot.slane %v15, %v55
    %v57 = vlaneseq
    %v58 = vshrl.u32 %v57, 7
    %v59 = vsub.s32 6, %v58
    %v60 = vrot.slane %v15, %v59
    %v65 = vlaneseq
    %v66 = vshrl.u32 %v65, 7
    %v67 = vsub.s32 0, %v66
    %v68 = vrot.slane %v48, %v67
    %v69 = vlaneseq
    %v70 = vshrl.u32 %v69, 7
    %v71 = vsub.s32 0, %v70
    %v72 = vrot.slane %v52, %v71
    %v73 = vlaneseq
    %v74 = vshrl.u32 %v73, 7
    %v75 = vsub.s32 0, %v74
    %v76 = vrot.slane %v56, %v75
    %v77 = vlaneseq
    %v78 = vshrl.u32 %v77, 7
    %v79 = vsub.s32 0, %v78
    %v80 = vrot.slane %v60, %v79
    %v81 = vmul.f32 %v27, %v68
    %v82 = vmul.f32 %v27, %v72
    %v83 = vmul.f32 %v27, %v76
    %v84 = vmul.f32 %v27, %v80
    %v85 = vmul.f32 %v32, %v68
    %v86 = vmul.f32 %v32, %v72
    %v87 = vmul.f32 %v32, %v76
    %v88 = vmul.f32 %v32, %v80
    %v89 = vmul.f32 %v37, %v68
    %v90 = vmul.f32 %v37, %v72
    %v91 = vmul.f32 %v37, %v76
    %v92 = vmul.f32 %v37, %v80
    %v93 = vmul.f32 %v42, %v68
    %v94 = vmul.f32 %v42, %v72
    %v95 = vmul.f32 %v42, %v76
    %v96 = vmul.f32 %v42, %v80
    %97 = vset.pattern.permute.xlu0 1
    %98 = vperm.xlu0 %97, %v16
    %v99 = vpop.permute.xlu0 %98
    %101 = vset.pattern.permute.xlu0 1
    %102 = vperm.xlu0 %101, %v17
    %v103 = vpop.permute.xlu0 %102
    %105 = vset.pattern.permute.xlu0 1
    %106 = vperm.xlu0 %105, %v18
    %v107 = vpop.permute.xlu0 %106
    %109 = vset.pattern.permute.xlu0 1
    %110 = vperm.xlu0 %109, %v19
    %v111 = vpop.permute.xlu0 %110
    %v113 = vlaneseq
    %v114 = vshrl.u32 %v113, 7
    %v115 = vsub.s32 1, %v114
    %v116 = vrot.slane %v15, %v115
    %v117 = vlaneseq
    %v118 = vshrl.u32 %v117, 7
    %v119 = vsub.s32 3, %v118
    %v120 = vrot.slane %v15, %v119
    %v121 = vlaneseq
    %v122 = vshrl.u32 %v121, 7
    %v123 = vsub.s32 5, %v122
    %v124 = vrot.slane %v15, %v123
    %v125 = vlaneseq
    %v126 = vshrl.u32 %v125, 7
    %v127 = vsub.s32 7, %v126
    %v128 = vrot.slane %v15, %v127
    %v133 = vlaneseq
    %v134 = vshrl.u32 %v133, 7
    %v135 = vsub.s32 1, %v134
    %v136 = vrot.slane %v116, %v135
    %v137 = vlaneseq
    %v138 = vshrl.u32 %v137, 7
    %v139 = vsub.s32 1, %v138
    %v140 = vrot.slane %v120, %v139
    %v141 = vlaneseq
    %v142 = vshrl.u32 %v141, 7
    %v143 = vsub.s32 1, %v142
    %v144 = vrot.slane %v124, %v143
    %v145 = vlaneseq
    %v146 = vshrl.u32 %v145, 7
    %v147 = vsub.s32 1, %v146
    %v148 = vrot.slane %v128, %v147
    %v149 = vmul.f32 %v99, %v136
    %v150 = vmul.f32 %v99, %v140
    %v151 = vmul.f32 %v99, %v144
    %v152 = vmul.f32 %v99, %v148
    %v153 = vmul.f32 %v103, %v136
    %v154 = vmul.f32 %v103, %v140
    %v155 = vmul.f32 %v103, %v144
    %v156 = vmul.f32 %v103, %v148
    %v157 = vmul.f32 %v107, %v136
    %v158 = vmul.f32 %v107, %v140
    %v159 = vmul.f32 %v107, %v144
    %v160 = vmul.f32 %v107, %v148
    %v161 = vmul.f32 %v111, %v136
    %v162 = vmul.f32 %v111, %v140
    %v163 = vmul.f32 %v111, %v144
    %v164 = vmul.f32 %v111, %v148
    %v165 = vadd.f32 %v81, %v149
    %v166 = vadd.f32 %v82, %v150
    %v167 = vadd.f32 %v83, %v151
    %v168 = vadd.f32 %v84, %v152
    %v169 = vadd.f32 %v85, %v153
    %v170 = vadd.f32 %v86, %v154
    %v171 = vadd.f32 %v87, %v155
    %v172 = vadd.f32 %v88, %v156
    %v173 = vadd.f32 %v89, %v157
    %v174 = vadd.f32 %v90, %v158
    %v175 = vadd.f32 %v91, %v159
    %v176 = vadd.f32 %v92, %v160
    %v177 = vadd.f32 %v93, %v161
    %v178 = vadd.f32 %v94, %v162
    %v179 = vadd.f32 %v95, %v163
    %v180 = vadd.f32 %v96, %v164
    %182 = vset.pattern.permute.xlu0 0
    %183 = vperm.xlu0 %182, %v20
    %v184 = vpop.permute.xlu0 %183
    %187 = vset.pattern.permute.xlu0 0
    %188 = vperm.xlu0 %187, %v21
    %v189 = vpop.permute.xlu0 %188
    %192 = vset.pattern.permute.xlu0 0
    %193 = vperm.xlu0 %192, %v22
    %v194 = vpop.permute.xlu0 %193
    %197 = vset.pattern.permute.xlu0 0
    %198 = vperm.xlu0 %197, %v23
    %v199 = vpop.permute.xlu0 %198
    %v201 = vadd.f32 %v165, %v184
    %v202 = vadd.f32 %v166, %v184
    %v203 = vadd.f32 %v167, %v184
    %v204 = vadd.f32 %v168, %v184
    %v205 = vadd.f32 %v169, %v189
    %v206 = vadd.f32 %v170, %v189
    %v207 = vadd.f32 %v171, %v189
    %v208 = vadd.f32 %v172, %v189
    %v209 = vadd.f32 %v173, %v194
    %v210 = vadd.f32 %v174, %v194
    %v211 = vadd.f32 %v175, %v194
    %v212 = vadd.f32 %v176, %v194
    %v213 = vadd.f32 %v177, %v199
    %v214 = vadd.f32 %v178, %v199
    %v215 = vadd.f32 %v179, %v199
    %v216 = vadd.f32 %v180, %v199
    %v217 = vand.u32 2147483647, %v201
    %vm218 = vcmp.le.f32.partialorder %v217, 0.7853982
    %vm219 = vcmp.lt.s32.totalorder %v201, 0
    %v220 = vand.u32 %v201, 2139095040
    %v221 = vshrl.u32 %v220, 23
    %v222 = vsub.s32 %v221, 127
    %v223 = vand.u32 2147483647, %v201
    %v224 = vand.u32 %v223, 8388607
    %v225 = vor.u32 %v224, 8388608
    %v226 = vsub.s32 0, %v225
    %v227 = vadd.s32 %v222, 1
    %vm228 = vcmp.gt.s32.totalorder %v227, 0
    %v229 = vsel %vm228, %v227, 0
    %v230 = vshrl.u32 %v229, 5
    %v231 = vand.u32 %v229, 31
    %v232 = vsub.s32 32, %v231
    %v233 = vshrl.u32 683565275, %v232
    %v234 = vshll.u32 683565275, %v231
    %v235 = vshrl.u32 2475754826, %v232
    %v236 = vor.u32 %v234, %v235
    %v237 = vshll.u32 2475754826, %v231
    %v238 = vshrl.u32 2131351028, %v232
    %v239 = vor.u32 %v237, %v238
    %v240 = vshll.u32 2131351028, %v231
    %v241 = vshrl.u32 2102212464, %v232
    %v242 = vor.u32 %v240, %v241
    %v243 = vshll.u32 2102212464, %v231
    %v244 = vshrl.u32 920167782, %v232
    %v245 = vor.u32 %v243, %v244
    %v246 = vshll.u32 920167782, %v231
    %v247 = vshrl.u32 1326507024, %v232
    %v248 = vor.u32 %v246, %v247
    %vm249 = vcmp.lt.s32.totalorder %v230, 1
    %vm250 = vcmp.lt.s32.totalorder %v230, 2
    %vm251 = vcmp.lt.s32.totalorder %v230, 3
    %vm252 = vcmp.lt.s32.totalorder %v230, 4
    %v253 = vsel %vm249, %v233, %v236
    %v254 = vsel %vm252, %v242, 2102212464
    %v255 = vsel %vm251, %v239, %v254
    %v256 = vsel %vm250, %v253, %v255
    %v257 = vsel %vm249, %v236, %v239
    %v258 = vsel %vm252, %v245, 920167782
    %v259 = vsel %vm251, %v242, %v258
    %v260 = vsel %vm250, %v257, %v259
    %v261 = vsel %vm249, %v239, %v242
    %v262 = vsel %vm252, %v248, 1326507024
    %v263 = vsel %vm251, %v245, %v262
    %v264 = vsel %vm250, %v261, %v263
    %v265 = vshll.u32 %v225, 8
    %v266 = vmul.u32.u64.compose %v265, %v264
    %v267 = vextract.low.u32 %v266
    %v268 = vextract.high.u32 %v266
    %v269 = vmul.u32.u64.compose %v265, %v260
    %v270 = vextract.low.u32 %v269
    %v271 = vextract.high.u32 %v269
    %v272 = vmul.u32 %v265, %v256
    %v273 = vadd.s32 %v268, %v270
    %vm274 = vc.u32 %v268, %v270
    %v275 = vadd.s32 %v271, 1
    %v276 = vsel %vm274, %v275, %v271
    %v277 = vadd.s32 %v272, %v276
    %v278 = vadd.s32 %v277, 536870912
    %v279 = vshrl.u32 %v278, 30
    %v280 = vshll.u32 %v279, 30
    %v281 = vsub.s32 %v277, %v280
    %vm282 = vcmp.lt.s32.totalorder %v281, 0
    %v283 = vsub.s32 0, %v281
    %v284 = vsel %vm282, %v283, %v281
    %v285 = vclz %v284
    %v286 = vsub.s32 %v285, 2
    %vm287 = vcmp.gt.s32.totalorder 0, %v286
    %v288 = vsel %vm287, 0, %v286
    %v289 = vsub.s32 32, %v288
    %v290 = vshll.u32 %v281, %v288
    %v291 = vshrl.u32 %v273, %v289
    %v292 = vor.u32 %v290, %v291
    %v293 = vsub.s32 4294967266, %v288
    %v294 = vadd.s32 %v293, 127
    %v295 = vshll.u32 %v294, 23
    %v296 = vor.u32 4788187, %v295
    %v297 = vand.u32 2147483647, %v296
    %v299 = vcvt.s32.f32 %v292
    %v300 = vmul.f32 %v299, %v297
    %v301 = vxor.u32 %v300, 2147483648
    %v302 = vsel %vm219, %v301, %v300
    %v303 = vsub.s32 4, %v279
    %v304 = vsel %vm219, %v303, %v279
    %v305 = vsel %vm218, %v201, %v302
    %v306 = vsel %vm218, 0, %v304
    %v307 = vcosq.f32.pop %v305
    %v308 = vsinq.f32.pop %v305
    %vm309 = vweird.f32 %v201
    %v310 = vadd.s32 %v306, 3
    %v311 = vand.u32 %v310, 3
    %vm312 = vcmp.lt.s32.totalorder %v311, 2
    %vm313 = vcmp.eq.s32.totalorder %v311, 0
    %v314 = vxor.u32 %v308, 2147483648
    %v315 = vsel %vm313, %v307, %v314
    %vm316 = vcmp.eq.s32.totalorder %v311, 2
    %v317 = vxor.u32 %v307, 2147483648
    %v318 = vsel %vm316, %v317, %v308
    %v319 = vsel %vm312, %v315, %v318
    %v320 = vsel %vm309, nan, %v319
    %v321 = vand.u32 2147483647, %v202
    %vm322 = vcmp.le.f32.partialorder %v321, 0.7853982
    %vm323 = vcmp.lt.s32.totalorder %v202, 0
    %v324 = vand.u32 %v202, 2139095040
    %v325 = vshrl.u32 %v324, 23
    %v326 = vsub.s32 %v325, 127
    %v327 = vand.u32 2147483647, %v202
    %v328 = vand.u32 %v327, 8388607
    %v329 = vor.u32 %v328, 8388608
    %v330 = vsub.s32 0, %v329
    %v331 = vadd.s32 %v326, 1
    %vm332 = vcmp.gt.s32.totalorder %v331, 0
    %v333 = vsel %vm332, %v331, 0
    %v334 = vshrl.u32 %v333, 5
    %v335 = vand.u32 %v333, 31
    %v336 = vsub.s32 32, %v335
    %v337 = vshrl.u32 683565275, %v336
    %v338 = vshll.u32 683565275, %v335
    %v339 = vshrl.u32 2475754826, %v336
    %v340 = vor.u32 %v338, %v339
    %v341 = vshll.u32 2475754826, %v335
    %v342 = vshrl.u32 2131351028, %v336
    %v343 = vor.u32 %v341, %v342
    %v344 = vshll.u32 2131351028, %v335
    %v345 = vshrl.u32 2102212464, %v336
    %v346 = vor.u32 %v344, %v345
    %v347 = vshll.u32 2102212464, %v335
    %v348 = vshrl.u32 920167782, %v336
    %v349 = vor.u32 %v347, %v348
    %v350 = vshll.u32 920167782, %v335
    %v351 = vshrl.u32 1326507024, %v336
    %v352 = vor.u32 %v350, %v351
    %vm353 = vcmp.lt.s32.totalorder %v334, 1
    %vm354 = vcmp.lt.s32.totalorder %v334, 2
    %vm355 = vcmp.lt.s32.totalorder %v334, 3
    %vm356 = vcmp.lt.s32.totalorder %v334, 4
    %v357 = vsel %vm353, %v337, %v340
    %v358 = vsel %vm356, %v346, 2102212464
    %v359 = vsel %vm355, %v343, %v358
    %v360 = vsel %vm354, %v357, %v359
    %v361 = vsel %vm353, %v340, %v343
    %v362 = vsel %vm356, %v349, 920167782
    %v363 = vsel %vm355, %v346, %v362
    %v364 = vsel %vm354, %v361, %v363
    %v365 = vsel %vm353, %v343, %v346
    %v366 = vsel %vm356, %v352, 1326507024
    %v367 = vsel %vm355, %v349, %v366
    %v368 = vsel %vm354, %v365, %v367
    %v369 = vshll.u32 %v329, 8
    %v370 = vmul.u32.u64.compose %v369, %v368
    %v371 = vextract.low.u32 %v370
    %v372 = vextract.high.u32 %v370
    %v373 = vmul.u32.u64.compose %v369, %v364
    %v374 = vextract.low.u32 %v373
    %v375 = vextract.high.u32 %v373
    %v376 = vmul.u32 %v369, %v360
    %v377 = vadd.s32 %v372, %v374
    %vm378 = vc.u32 %v372, %v374
    %v379 = vadd.s32 %v375, 1
    %v380 = vsel %vm378, %v379, %v375
    %v381 = vadd.s32 %v376, %v380
    %v382 = vadd.s32 %v381, 536870912
    %v383 = vshrl.u32 %v382, 30
    %v384 = vshll.u32 %v383, 30
    %v385 = vsub.s32 %v381, %v384
    %vm386 = vcmp.lt.s32.totalorder %v385, 0
    %v387 = vsub.s32 0, %v385
    %v388 = vsel %vm386, %v387, %v385
    %v389 = vclz %v388
    %v390 = vsub.s32 %v389, 2
    %vm391 = vcmp.gt.s32.totalorder 0, %v390
    %v392 = vsel %vm391, 0, %v390
    %v393 = vsub.s32 32, %v392
    %v394 = vshll.u32 %v385, %v392
    %v395 = vshrl.u32 %v377, %v393
    %v396 = vor.u32 %v394, %v395
    %v397 = vsub.s32 4294967266, %v392
    %v398 = vadd.s32 %v397, 127
    %v399 = vshll.u32 %v398, 23
    %v400 = vor.u32 4788187, %v399
    %v401 = vand.u32 2147483647, %v400
    %v403 = vcvt.s32.f32 %v396
    %v404 = vmul.f32 %v403, %v401
    %v405 = vxor.u32 %v404, 2147483648
    %v406 = vsel %vm323, %v405, %v404
    %v407 = vsub.s32 4, %v383
    %v408 = vsel %vm323, %v407, %v383
    %v409 = vsel %vm322, %v202, %v406
    %v410 = vsel %vm322, 0, %v408
    %v411 = vcosq.f32.pop %v409
    %v412 = vsinq.f32.pop %v409
    %vm413 = vweird.f32 %v202
    %v414 = vadd.s32 %v410, 3
    %v415 = vand.u32 %v414, 3
    %vm416 = vcmp.lt.s32.totalorder %v415, 2
    %vm417 = vcmp.eq.s32.totalorder %v415, 0
    %v418 = vxor.u32 %v412, 2147483648
    %v419 = vsel %vm417, %v411, %v418
    %vm420 = vcmp.eq.s32.totalorder %v415, 2
    %v421 = vxor.u32 %v411, 2147483648
    %v422 = vsel %vm420, %v421, %v412
    %v423 = vsel %vm416, %v419, %v422
    %v424 = vsel %vm413, nan, %v423
    %v425 = vand.u32 2147483647, %v203
    %vm426 = vcmp.le.f32.partialorder %v425, 0.7853982
    %vm427 = vcmp.lt.s32.totalorder %v203, 0
    %v428 = vand.u32 %v203, 2139095040
    %v429 = vshrl.u32 %v428, 23
    %v430 = vsub.s32 %v429, 127
    %v431 = vand.u32 2147483647, %v203
    %v432 = vand.u32 %v431, 8388607
    %v433 = vor.u32 %v432, 8388608
    %v434 = vsub.s32 0, %v433
    %v435 = vadd.s32 %v430, 1
    %vm436 = vcmp.gt.s32.totalorder %v435, 0
    %v437 = vsel %vm436, %v435, 0
    %v438 = vshrl.u32 %v437, 5
    %v439 = vand.u32 %v437, 31
    %v440 = vsub.s32 32, %v439
    %v441 = vshrl.u32 683565275, %v440
    %v442 = vshll.u32 683565275, %v439
    %v443 = vshrl.u32 2475754826, %v440
    %v444 = vor.u32 %v442, %v443
    %v445 = vshll.u32 2475754826, %v439
    %v446 = vshrl.u32 2131351028, %v440
    %v447 = vor.u32 %v445, %v446
    %v448 = vshll.u32 2131351028, %v439
    %v449 = vshrl.u32 2102212464, %v440
    %v450 = vor.u32 %v448, %v449
    %v451 = vshll.u32 2102212464, %v439
    %v452 = vshrl.u32 920167782, %v440
    %v453 = vor.u32 %v451, %v452
    %v454 = vshll.u32 920167782, %v439
    %v455 = vshrl.u32 1326507024, %v440
    %v456 = vor.u32 %v454, %v455
    %vm457 = vcmp.lt.s32.totalorder %v438, 1
    %vm458 = vcmp.lt.s32.totalorder %v438, 2
    %vm459 = vcmp.lt.s32.totalorder %v438, 3
    %vm460 = vcmp.lt.s32.totalorder %v438, 4
    %v461 = vsel %vm457, %v441, %v444
    %v462 = vsel %vm460, %v450, 2102212464
    %v463 = vsel %vm459, %v447, %v462
    %v464 = vsel %vm458, %v461, %v463
    %v465 = vsel %vm457, %v444, %v447
    %v466 = vsel %vm460, %v453, 920167782
    %v467 = vsel %vm459, %v450, %v466
    %v468 = vsel %vm458, %v465, %v467
    %v469 = vsel %vm457, %v447, %v450
    %v470 = vsel %vm460, %v456, 1326507024
    %v471 = vsel %vm459, %v453, %v470
    %v472 = vsel %vm458, %v469, %v471
    %v473 = vshll.u32 %v433, 8
    %v474 = vmul.u32.u64.compose %v473, %v472
    %v475 = vextract.low.u32 %v474
    %v476 = vextract.high.u32 %v474
    %v477 = vmul.u32.u64.compose %v473, %v468
    %v478 = vextract.low.u32 %v477
    %v479 = vextract.high.u32 %v477
    %v480 = vmul.u32 %v473, %v464
    %v481 = vadd.s32 %v476, %v478
    %vm482 = vc.u32 %v476, %v478
    %v483 = vadd.s32 %v479, 1
    %v484 = vsel %vm482, %v483, %v479
    %v485 = vadd.s32 %v480, %v484
    %v486 = vadd.s32 %v485, 536870912
    %v487 = vshrl.u32 %v486, 30
    %v488 = vshll.u32 %v487, 30
    %v489 = vsub.s32 %v485, %v488
    %vm490 = vcmp.lt.s32.totalorder %v489, 0
    %v491 = vsub.s32 0, %v489
    %v492 = vsel %vm490, %v491, %v489
    %v493 = vclz %v492
    %v494 = vsub.s32 %v493, 2
    %vm495 = vcmp.gt.s32.totalorder 0, %v494
    %v496 = vsel %vm495, 0, %v494
    %v497 = vsub.s32 32, %v496
    %v498 = vshll.u32 %v489, %v496
    %v499 = vshrl.u32 %v481, %v497
    %v500 = vor.u32 %v498, %v499
    %v501 = vsub.s32 4294967266, %v496
    %v502 = vadd.s32 %v501, 127
    %v503 = vshll.u32 %v502, 23
    %v504 = vor.u32 4788187, %v503
    %v505 = vand.u32 2147483647, %v504
    %v507 = vcvt.s32.f32 %v500
    %v508 = vmul.f32 %v507, %v505
    %v509 = vxor.u32 %v508, 2147483648
    %v510 = vsel %vm427, %v509, %v508
    %v511 = vsub.s32 4, %v487
    %v512 = vsel %vm427, %v511, %v487
    %v513 = vsel %vm426, %v203, %v510
    %v514 = vsel %vm426, 0, %v512
    %v515 = vcosq.f32.pop %v513
    %v516 = vsinq.f32.pop %v513
    %vm517 = vweird.f32 %v203
    %v518 = vadd.s32 %v514, 3
    %v519 = vand.u32 %v518, 3
    %vm520 = vcmp.lt.s32.totalorder %v519, 2
    %vm521 = vcmp.eq.s32.totalorder %v519, 0
    %v522 = vxor.u32 %v516, 2147483648
    %v523 = vsel %vm521, %v515, %v522
    %vm524 = vcmp.eq.s32.totalorder %v519, 2
    %v525 = vxor.u32 %v515, 2147483648
    %v526 = vsel %vm524, %v525, %v516
    %v527 = vsel %vm520, %v523, %v526
    %v528 = vsel %vm517, nan, %v527
    %v529 = vand.u32 2147483647, %v204
    %vm530 = vcmp.le.f32.partialorder %v529, 0.7853982
    %vm531 = vcmp.lt.s32.totalorder %v204, 0
    %v532 = vand.u32 %v204, 2139095040
    %v533 = vshrl.u32 %v532, 23
    %v534 = vsub.s32 %v533, 127
    %v535 = vand.u32 2147483647, %v204
    %v536 = vand.u32 %v535, 8388607
    %v537 = vor.u32 %v536, 8388608
    %v538 = vsub.s32 0, %v537
    %v539 = vadd.s32 %v534, 1
    %vm540 = vcmp.gt.s32.totalorder %v539, 0
    %v541 = vsel %vm540, %v539, 0
    %v542 = vshrl.u32 %v541, 5
    %v543 = vand.u32 %v541, 31
    %v544 = vsub.s32 32, %v543
    %v545 = vshrl.u32 683565275, %v544
    %v546 = vshll.u32 683565275, %v543
    %v547 = vshrl.u32 2475754826, %v544
    %v548 = vor.u32 %v546, %v547
    %v549 = vshll.u32 2475754826, %v543
    %v550 = vshrl.u32 2131351028, %v544
    %v551 = vor.u32 %v549, %v550
    %v552 = vshll.u32 2131351028, %v543
    %v553 = vshrl.u32 2102212464, %v544
    %v554 = vor.u32 %v552, %v553
    %v555 = vshll.u32 2102212464, %v543
    %v556 = vshrl.u32 920167782, %v544
    %v557 = vor.u32 %v555, %v556
    %v558 = vshll.u32 920167782, %v543
    %v559 = vshrl.u32 1326507024, %v544
    %v560 = vor.u32 %v558, %v559
    %vm561 = vcmp.lt.s32.totalorder %v542, 1
    %vm562 = vcmp.lt.s32.totalorder %v542, 2
    %vm563 = vcmp.lt.s32.totalorder %v542, 3
    %vm564 = vcmp.lt.s32.totalorder %v542, 4
    %v565 = vsel %vm561, %v545, %v548
    %v566 = vsel %vm564, %v554, 2102212464
    %v567 = vsel %vm563, %v551, %v566
    %v568 = vsel %vm562, %v565, %v567
    %v569 = vsel %vm561, %v548, %v551
    %v570 = vsel %vm564, %v557, 920167782
    %v571 = vsel %vm563, %v554, %v570
    %v572 = vsel %vm562, %v569, %v571
    %v573 = vsel %vm561, %v551, %v554
    %v574 = vsel %vm564, %v560, 1326507024
    %v575 = vsel %vm563, %v557, %v574
    %v576 = vsel %vm562, %v573, %v575
    %v577 = vshll.u32 %v537, 8
    %v578 = vmul.u32.u64.compose %v577, %v576
    %v579 = vextract.low.u32 %v578
    %v580 = vextract.high.u32 %v578
    %v581 = vmul.u32.u64.compose %v577, %v572
    %v582 = vextract.low.u32 %v581
    %v583 = vextract.high.u32 %v581
    %v584 = vmul.u32 %v577, %v568
    %v585 = vadd.s32 %v580, %v582
    %vm586 = vc.u32 %v580, %v582
    %v587 = vadd.s32 %v583, 1
    %v588 = vsel %vm586, %v587, %v583
    %v589 = vadd.s32 %v584, %v588
    %v590 = vadd.s32 %v589, 536870912
    %v591 = vshrl.u32 %v590, 30
    %v592 = vshll.u32 %v591, 30
    %v593 = vsub.s32 %v589, %v592
    %vm594 = vcmp.lt.s32.totalorder %v593, 0
    %v595 = vsub.s32 0, %v593
    %v596 = vsel %vm594, %v595, %v593
    %v597 = vclz %v596
    %v598 = vsub.s32 %v597, 2
    %vm599 = vcmp.gt.s32.totalorder 0, %v598
    %v600 = vsel %vm599, 0, %v598
    %v601 = vsub.s32 32, %v600
    %v602 = vshll.u32 %v593, %v600
    %v603 = vshrl.u32 %v585, %v601
    %v604 = vor.u32 %v602, %v603
    %v605 = vsub.s32 4294967266, %v600
    %v606 = vadd.s32 %v605, 127
    %v607 = vshll.u32 %v606, 23
    %v608 = vor.u32 4788187, %v607
    %v609 = vand.u32 2147483647, %v608
    %v611 = vcvt.s32.f32 %v604
    %v612 = vmul.f32 %v611, %v609
    %v613 = vxor.u32 %v612, 2147483648
    %v614 = vsel %vm531, %v613, %v612
    %v615 = vsub.s32 4, %v591
    %v616 = vsel %vm531, %v615, %v591
    %v617 = vsel %vm530, %v204, %v614
    %v618 = vsel %vm530, 0, %v616
    %v619 = vcosq.f32.pop %v617
    %v620 = vsinq.f32.pop %v617
    %vm621 = vweird.f32 %v204
    %v622 = vadd.s32 %v618, 3
    %v623 = vand.u32 %v622, 3
    %vm624 = vcmp.lt.s32.totalorder %v623, 2
    %vm625 = vcmp.eq.s32.totalorder %v623, 0
    %v626 = vxor.u32 %v620, 2147483648
    %v627 = vsel %vm625, %v619, %v626
    %vm628 = vcmp.eq.s32.totalorder %v623, 2
    %v629 = vxor.u32 %v619, 2147483648
    %v630 = vsel %vm628, %v629, %v620
    %v631 = vsel %vm624, %v627, %v630
    %v632 = vsel %vm621, nan, %v631
    %v633 = vand.u32 2147483647, %v205
    %vm634 = vcmp.le.f32.partialorder %v633, 0.7853982
    %vm635 = vcmp.lt.s32.totalorder %v205, 0
    %v636 = vand.u32 %v205, 2139095040
    %v637 = vshrl.u32 %v636, 23
    %v638 = vsub.s32 %v637, 127
    %v639 = vand.u32 2147483647, %v205
    %v640 = vand.u32 %v639, 8388607
    %v641 = vor.u32 %v640, 8388608
    %v642 = vsub.s32 0, %v641
    %v643 = vadd.s32 %v638, 1
    %vm644 = vcmp.gt.s32.totalorder %v643, 0
    %v645 = vsel %vm644, %v643, 0
    %v646 = vshrl.u32 %v645, 5
    %v647 = vand.u32 %v645, 31
    %v648 = vsub.s32 32, %v647
    %v649 = vshrl.u32 683565275, %v648
    %v650 = vshll.u32 683565275, %v647
    %v651 = vshrl.u32 2475754826, %v648
    %v652 = vor.u32 %v650, %v651
    %v653 = vshll.u32 2475754826, %v647
    %v654 = vshrl.u32 2131351028, %v648
    %v655 = vor.u32 %v653, %v654
    %v656 = vshll.u32 2131351028, %v647
    %v657 = vshrl.u32 2102212464, %v648
    %v658 = vor.u32 %v656, %v657
    %v659 = vshll.u32 2102212464, %v647
    %v660 = vshrl.u32 920167782, %v648
    %v661 = vor.u32 %v659, %v660
    %v662 = vshll.u32 920167782, %v647
    %v663 = vshrl.u32 1326507024, %v648
    %v664 = vor.u32 %v662, %v663
    %vm665 = vcmp.lt.s32.totalorder %v646, 1
    %vm666 = vcmp.lt.s32.totalorder %v646, 2
    %vm667 = vcmp.lt.s32.totalorder %v646, 3
    %vm668 = vcmp.lt.s32.totalorder %v646, 4
    %v669 = vsel %vm665, %v649, %v652
    %v670 = vsel %vm668, %v658, 2102212464
    %v671 = vsel %vm667, %v655, %v670
    %v672 = vsel %vm666, %v669, %v671
    %v673 = vsel %vm665, %v652, %v655
    %v674 = vsel %vm668, %v661, 920167782
    %v675 = vsel %vm667, %v658, %v674
    %v676 = vsel %vm666, %v673, %v675
    %v677 = vsel %vm665, %v655, %v658
    %v678 = vsel %vm668, %v664, 1326507024
    %v679 = vsel %vm667, %v661, %v678
    %v680 = vsel %vm666, %v677, %v679
    %v681 = vshll.u32 %v641, 8
    %v682 = vmul.u32.u64.compose %v681, %v680
    %v683 = vextract.low.u32 %v682
    %v684 = vextract.high.u32 %v682
    %v685 = vmul.u32.u64.compose %v681, %v676
    %v686 = vextract.low.u32 %v685
    %v687 = vextract.high.u32 %v685
    %v688 = vmul.u32 %v681, %v672
    %v689 = vadd.s32 %v684, %v686
    %vm690 = vc.u32 %v684, %v686
    %v691 = vadd.s32 %v687, 1
    %v692 = vsel %vm690, %v691, %v687
    %v693 = vadd.s32 %v688, %v692
    %v694 = vadd.s32 %v693, 536870912
    %v695 = vshrl.u32 %v694, 30
    %v696 = vshll.u32 %v695, 30
    %v697 = vsub.s32 %v693, %v696
    %vm698 = vcmp.lt.s32.totalorder %v697, 0
    %v699 = vsub.s32 0, %v697
    %v700 = vsel %vm698, %v699, %v697
    %v701 = vclz %v700
    %v702 = vsub.s32 %v701, 2
    %vm703 = vcmp.gt.s32.totalorder 0, %v702
    %v704 = vsel %vm703, 0, %v702
    %v705 = vsub.s32 32, %v704
    %v706 = vshll.u32 %v697, %v704
    %v707 = vshrl.u32 %v689, %v705
    %v708 = vor.u32 %v706, %v707
    %v709 = vsub.s32 4294967266, %v704
    %v710 = vadd.s32 %v709, 127
    %v711 = vshll.u32 %v710, 23
    %v712 = vor.u32 4788187, %v711
    %v713 = vand.u32 2147483647, %v712
    %v715 = vcvt.s32.f32 %v708
    %v716 = vmul.f32 %v715, %v713
    %v717 = vxor.u32 %v716, 2147483648
    %v718 = vsel %vm635, %v717, %v716
    %v719 = vsub.s32 4, %v695
    %v720 = vsel %vm635, %v719, %v695
    %v721 = vsel %vm634, %v205, %v718
    %v722 = vsel %vm634, 0, %v720
    %v723 = vcosq.f32.pop %v721
    %v724 = vsinq.f32.pop %v721
    %vm725 = vweird.f32 %v205
    %v726 = vadd.s32 %v722, 3
    %v727 = vand.u32 %v726, 3
    %vm728 = vcmp.lt.s32.totalorder %v727, 2
    %vm729 = vcmp.eq.s32.totalorder %v727, 0
    %v730 = vxor.u32 %v724, 2147483648
    %v731 = vsel %vm729, %v723, %v730
    %vm732 = vcmp.eq.s32.totalorder %v727, 2
    %v733 = vxor.u32 %v723, 2147483648
    %v734 = vsel %vm732, %v733, %v724
    %v735 = vsel %vm728, %v731, %v734
    %v736 = vsel %vm725, nan, %v735
    %v737 = vand.u32 2147483647, %v206
    %vm738 = vcmp.le.f32.partialorder %v737, 0.7853982
    %vm739 = vcmp.lt.s32.totalorder %v206, 0
    %v740 = vand.u32 %v206, 2139095040
    %v741 = vshrl.u32 %v740, 23
    %v742 = vsub.s32 %v741, 127
    %v743 = vand.u32 2147483647, %v206
    %v744 = vand.u32 %v743, 8388607
    %v745 = vor.u32 %v744, 8388608
    %v746 = vsub.s32 0, %v745
    %v747 = vadd.s32 %v742, 1
    %vm748 = vcmp.gt.s32.totalorder %v747, 0
    %v749 = vsel %vm748, %v747, 0
    %v750 = vshrl.u32 %v749, 5
    %v751 = vand.u32 %v749, 31
    %v752 = vsub.s32 32, %v751
    %v753 = vshrl.u32 683565275, %v752
    %v754 = vshll.u32 683565275, %v751
    %v755 = vshrl.u32 2475754826, %v752
    %v756 = vor.u32 %v754, %v755
    %v757 = vshll.u32 2475754826, %v751
    %v758 = vshrl.u32 2131351028, %v752
    %v759 = vor.u32 %v757, %v758
    %v760 = vshll.u32 2131351028, %v751
    %v761 = vshrl.u32 2102212464, %v752
    %v762 = vor.u32 %v760, %v761
    %v763 = vshll.u32 2102212464, %v751
    %v764 = vshrl.u32 920167782, %v752
    %v765 = vor.u32 %v763, %v764
    %v766 = vshll.u32 920167782, %v751
    %v767 = vshrl.u32 1326507024, %v752
    %v768 = vor.u32 %v766, %v767
    %vm769 = vcmp.lt.s32.totalorder %v750, 1
    %vm770 = vcmp.lt.s32.totalorder %v750, 2
    %vm771 = vcmp.lt.s32.totalorder %v750, 3
    %vm772 = vcmp.lt.s32.totalorder %v750, 4
    %v773 = vsel %vm769, %v753, %v756
    %v774 = vsel %vm772, %v762, 2102212464
    %v775 = vsel %vm771, %v759, %v774
    %v776 = vsel %vm770, %v773, %v775
    %v777 = vsel %vm769, %v756, %v759
    %v778 = vsel %vm772, %v765, 920167782
    %v779 = vsel %vm771, %v762, %v778
    %v780 = vsel %vm770, %v777, %v779
    %v781 = vsel %vm769, %v759, %v762
    %v782 = vsel %vm772, %v768, 1326507024
    %v783 = vsel %vm771, %v765, %v782
    %v784 = vsel %vm770, %v781, %v783
    %v785 = vshll.u32 %v745, 8
    %v786 = vmul.u32.u64.compose %v785, %v784
    %v787 = vextract.low.u32 %v786
    %v788 = vextract.high.u32 %v786
    %v789 = vmul.u32.u64.compose %v785, %v780
    %v790 = vextract.low.u32 %v789
    %v791 = vextract.high.u32 %v789
    %v792 = vmul.u32 %v785, %v776
    %v793 = vadd.s32 %v788, %v790
    %vm794 = vc.u32 %v788, %v790
    %v795 = vadd.s32 %v791, 1
    %v796 = vsel %vm794, %v795, %v791
    %v797 = vadd.s32 %v792, %v796
    %v798 = vadd.s32 %v797, 536870912
    %v799 = vshrl.u32 %v798, 30
    %v800 = vshll.u32 %v799, 30
    %v801 = vsub.s32 %v797, %v800
    %vm802 = vcmp.lt.s32.totalorder %v801, 0
    %v803 = vsub.s32 0, %v801
    %v804 = vsel %vm802, %v803, %v801
    %v805 = vclz %v804
    %v806 = vsub.s32 %v805, 2
    %vm807 = vcmp.gt.s32.totalorder 0, %v806
    %v808 = vsel %vm807, 0, %v806
    %v809 = vsub.s32 32, %v808
    %v810 = vshll.u32 %v801, %v808
    %v811 = vshrl.u32 %v793, %v809
    %v812 = vor.u32 %v810, %v811
    %v813 = vsub.s32 4294967266, %v808
    %v814 = vadd.s32 %v813, 127
    %v815 = vshll.u32 %v814, 23
    %v816 = vor.u32 4788187, %v815
    %v817 = vand.u32 2147483647, %v816
    %v819 = vcvt.s32.f32 %v812
    %v820 = vmul.f32 %v819, %v817
    %v821 = vxor.u32 %v820, 2147483648
    %v822 = vsel %vm739, %v821, %v820
    %v823 = vsub.s32 4, %v799
    %v824 = vsel %vm739, %v823, %v799
    %v825 = vsel %vm738, %v206, %v822
    %v826 = vsel %vm738, 0, %v824
    %v827 = vcosq.f32.pop %v825
    %v828 = vsinq.f32.pop %v825
    %vm829 = vweird.f32 %v206
    %v830 = vadd.s32 %v826, 3
    %v831 = vand.u32 %v830, 3
    %vm832 = vcmp.lt.s32.totalorder %v831, 2
    %vm833 = vcmp.eq.s32.totalorder %v831, 0
    %v834 = vxor.u32 %v828, 2147483648
    %v835 = vsel %vm833, %v827, %v834
    %vm836 = vcmp.eq.s32.totalorder %v831, 2
    %v837 = vxor.u32 %v827, 2147483648
    %v838 = vsel %vm836, %v837, %v828
    %v839 = vsel %vm832, %v835, %v838
    %v840 = vsel %vm829, nan, %v839
    %v841 = vand.u32 2147483647, %v207
    %vm842 = vcmp.le.f32.partialorder %v841, 0.7853982
    %vm843 = vcmp.lt.s32.totalorder %v207, 0
    %v844 = vand.u32 %v207, 2139095040
    %v845 = vshrl.u32 %v844, 23
    %v846 = vsub.s32 %v845, 127
    %v847 = vand.u32 2147483647, %v207
    %v848 = vand.u32 %v847, 8388607
    %v849 = vor.u32 %v848, 8388608
    %v850 = vsub.s32 0, %v849
    %v851 = vadd.s32 %v846, 1
    %vm852 = vcmp.gt.s32.totalorder %v851, 0
    %v853 = vsel %vm852, %v851, 0
    %v854 = vshrl.u32 %v853, 5
    %v855 = vand.u32 %v853, 31
    %v856 = vsub.s32 32, %v855
    %v857 = vshrl.u32 683565275, %v856
    %v858 = vshll.u32 683565275, %v855
    %v859 = vshrl.u32 2475754826, %v856
    %v860 = vor.u32 %v858, %v859
    %v861 = vshll.u32 2475754826, %v855
    %v862 = vshrl.u32 2131351028, %v856
    %v863 = vor.u32 %v861, %v862
    %v864 = vshll.u32 2131351028, %v855
    %v865 = vshrl.u32 2102212464, %v856
    %v866 = vor.u32 %v864, %v865
    %v867 = vshll.u32 2102212464, %v855
    %v868 = vshrl.u32 920167782, %v856
    %v869 = vor.u32 %v867, %v868
    %v870 = vshll.u32 920167782, %v855
    %v871 = vshrl.u32 1326507024, %v856
    %v872 = vor.u32 %v870, %v871
    %vm873 = vcmp.lt.s32.totalorder %v854, 1
    %vm874 = vcmp.lt.s32.totalorder %v854, 2
    %vm875 = vcmp.lt.s32.totalorder %v854, 3
    %vm876 = vcmp.lt.s32.totalorder %v854, 4
    %v877 = vsel %vm873, %v857, %v860
    %v878 = vsel %vm876, %v866, 2102212464
    %v879 = vsel %vm875, %v863, %v878
    %v880 = vsel %vm874, %v877, %v879
    %v881 = vsel %vm873, %v860, %v863
    %v882 = vsel %vm876, %v869, 920167782
    %v883 = vsel %vm875, %v866, %v882
    %v884 = vsel %vm874, %v881, %v883
    %v885 = vsel %vm873, %v863, %v866
    %v886 = vsel %vm876, %v872, 1326507024
    %v887 = vsel %vm875, %v869, %v886
    %v888 = vsel %vm874, %v885, %v887
    %v889 = vshll.u32 %v849, 8
    %v890 = vmul.u32.u64.compose %v889, %v888
    %v891 = vextract.low.u32 %v890
    %v892 = vextract.high.u32 %v890
    %v893 = vmul.u32.u64.compose %v889, %v884
    %v894 = vextract.low.u32 %v893
    %v895 = vextract.high.u32 %v893
    %v896 = vmul.u32 %v889, %v880
    %v897 = vadd.s32 %v892, %v894
    %vm898 = vc.u32 %v892, %v894
    %v899 = vadd.s32 %v895, 1
    %v900 = vsel %vm898, %v899, %v895
    %v901 = vadd.s32 %v896, %v900
    %v902 = vadd.s32 %v901, 536870912
    %v903 = vshrl.u32 %v902, 30
    %v904 = vshll.u32 %v903, 30
    %v905 = vsub.s32 %v901, %v904
    %vm906 = vcmp.lt.s32.totalorder %v905, 0
    %v907 = vsub.s32 0, %v905
    %v908 = vsel %vm906, %v907, %v905
    %v909 = vclz %v908
    %v910 = vsub.s32 %v909, 2
    %vm911 = vcmp.gt.s32.totalorder 0, %v910
    %v912 = vsel %vm911, 0, %v910
    %v913 = vsub.s32 32, %v912
    %v914 = vshll.u32 %v905, %v912
    %v915 = vshrl.u32 %v897, %v913
    %v916 = vor.u32 %v914, %v915
    %v917 = vsub.s32 4294967266, %v912
    %v918 = vadd.s32 %v917, 127
    %v919 = vshll.u32 %v918, 23
    %v920 = vor.u32 4788187, %v919
    %v921 = vand.u32 2147483647, %v920
    %v923 = vcvt.s32.f32 %v916
    %v924 = vmul.f32 %v923, %v921
    %v925 = vxor.u32 %v924, 2147483648
    %v926 = vsel %vm843, %v925, %v924
    %v927 = vsub.s32 4, %v903
    %v928 = vsel %vm843, %v927, %v903
    %v929 = vsel %vm842, %v207, %v926
    %v930 = vsel %vm842, 0, %v928
    %v931 = vcosq.f32.pop %v929
    %v932 = vsinq.f32.pop %v929
    %vm933 = vweird.f32 %v207
    %v934 = vadd.s32 %v930, 3
    %v935 = vand.u32 %v934, 3
    %vm936 = vcmp.lt.s32.totalorder %v935, 2
    %vm937 = vcmp.eq.s32.totalorder %v935, 0
    %v938 = vxor.u32 %v932, 2147483648
    %v939 = vsel %vm937, %v931, %v938
    %vm940 = vcmp.eq.s32.totalorder %v935, 2
    %v941 = vxor.u32 %v931, 2147483648
    %v942 = vsel %vm940, %v941, %v932
    %v943 = vsel %vm936, %v939, %v942
    %v944 = vsel %vm933, nan, %v943
    %v945 = vand.u32 2147483647, %v208
    %vm946 = vcmp.le.f32.partialorder %v945, 0.7853982
    %vm947 = vcmp.lt.s32.totalorder %v208, 0
    %v948 = vand.u32 %v208, 2139095040
    %v949 = vshrl.u32 %v948, 23
    %v950 = vsub.s32 %v949, 127
    %v951 = vand.u32 2147483647, %v208
    %v952 = vand.u32 %v951, 8388607
    %v953 = vor.u32 %v952, 8388608
    %v954 = vsub.s32 0, %v953
    %v955 = vadd.s32 %v950, 1
    %vm956 = vcmp.gt.s32.totalorder %v955, 0
    %v957 = vsel %vm956, %v955, 0
    %v958 = vshrl.u32 %v957, 5
    %v959 = vand.u32 %v957, 31
    %v960 = vsub.s32 32, %v959
    %v961 = vshrl.u32 683565275, %v960
    %v962 = vshll.u32 683565275, %v959
    %v963 = vshrl.u32 2475754826, %v960
    %v964 = vor.u32 %v962, %v963
    %v965 = vshll.u32 2475754826, %v959
    %v966 = vshrl.u32 2131351028, %v960
    %v967 = vor.u32 %v965, %v966
    %v968 = vshll.u32 2131351028, %v959
    %v969 = vshrl.u32 2102212464, %v960
    %v970 = vor.u32 %v968, %v969
    %v971 = vshll.u32 2102212464, %v959
    %v972 = vshrl.u32 920167782, %v960
    %v973 = vor.u32 %v971, %v972
    %v974 = vshll.u32 920167782, %v959
    %v975 = vshrl.u32 1326507024, %v960
    %v976 = vor.u32 %v974, %v975
    %vm977 = vcmp.lt.s32.totalorder %v958, 1
    %vm978 = vcmp.lt.s32.totalorder %v958, 2
    %vm979 = vcmp.lt.s32.totalorder %v958, 3
    %vm980 = vcmp.lt.s32.totalorder %v958, 4
    %v981 = vsel %vm977, %v961, %v964
    %v982 = vsel %vm980, %v970, 2102212464
    %v983 = vsel %vm979, %v967, %v982
    %v984 = vsel %vm978, %v981, %v983
    %v985 = vsel %vm977, %v964, %v967
    %v986 = vsel %vm980, %v973, 920167782
    %v987 = vsel %vm979, %v970, %v986
    %v988 = vsel %vm978, %v985, %v987
    %v989 = vsel %vm977, %v967, %v970
    %v990 = vsel %vm980, %v976, 1326507024
    %v991 = vsel %vm979, %v973, %v990
    %v992 = vsel %vm978, %v989, %v991
    %v993 = vshll.u32 %v953, 8
    %v994 = vmul.u32.u64.compose %v993, %v992
    %v995 = vextract.low.u32 %v994
    %v996 = vextract.high.u32 %v994
    %v997 = vmul.u32.u64.compose %v993, %v988
    %v998 = vextract.low.u32 %v997
    %v999 = vextract.high.u32 %v997
    %v1000 = vmul.u32 %v993, %v984
    %v1001 = vadd.s32 %v996, %v998
    %vm1002 = vc.u32 %v996, %v998
    %v1003 = vadd.s32 %v999, 1
    %v1004 = vsel %vm1002, %v1003, %v999
    %v1005 = vadd.s32 %v1000, %v1004
    %v1006 = vadd.s32 %v1005, 536870912
    %v1007 = vshrl.u32 %v1006, 30
    %v1008 = vshll.u32 %v1007, 30
    %v1009 = vsub.s32 %v1005, %v1008
    %vm1010 = vcmp.lt.s32.totalorder %v1009, 0
    %v1011 = vsub.s32 0, %v1009
    %v1012 = vsel %vm1010, %v1011, %v1009
    %v1013 = vclz %v1012
    %v1014 = vsub.s32 %v1013, 2
    %vm1015 = vcmp.gt.s32.totalorder 0, %v1014
    %v1016 = vsel %vm1015, 0, %v1014
    %v1017 = vsub.s32 32, %v1016
    %v1018 = vshll.u32 %v1009, %v1016
    %v1019 = vshrl.u32 %v1001, %v1017
    %v1020 = vor.u32 %v1018, %v1019
    %v1021 = vsub.s32 4294967266, %v1016
    %v1022 = vadd.s32 %v1021, 127
    %v1023 = vshll.u32 %v1022, 23
    %v1024 = vor.u32 4788187, %v1023
    %v1025 = vand.u32 2147483647, %v1024
    %v1027 = vcvt.s32.f32 %v1020
    %v1028 = vmul.f32 %v1027, %v1025
    %v1029 = vxor.u32 %v1028, 2147483648
    %v1030 = vsel %vm947, %v1029, %v1028
    %v1031 = vsub.s32 4, %v1007
    %v1032 = vsel %vm947, %v1031, %v1007
    %v1033 = vsel %vm946, %v208, %v1030
    %v1034 = vsel %vm946, 0, %v1032
    %v1035 = vcosq.f32.pop %v1033
    %v1036 = vsinq.f32.pop %v1033
    %vm1037 = vweird.f32 %v208
    %v1038 = vadd.s32 %v1034, 3
    %v1039 = vand.u32 %v1038, 3
    %vm1040 = vcmp.lt.s32.totalorder %v1039, 2
    %vm1041 = vcmp.eq.s32.totalorder %v1039, 0
    %v1042 = vxor.u32 %v1036, 2147483648
    %v1043 = vsel %vm1041, %v1035, %v1042
    %vm1044 = vcmp.eq.s32.totalorder %v1039, 2
    %v1045 = vxor.u32 %v1035, 2147483648
    %v1046 = vsel %vm1044, %v1045, %v1036
    %v1047 = vsel %vm1040, %v1043, %v1046
    %v1048 = vsel %vm1037, nan, %v1047
    %v1049 = vand.u32 2147483647, %v209
    %vm1050 = vcmp.le.f32.partialorder %v1049, 0.7853982
    %vm1051 = vcmp.lt.s32.totalorder %v209, 0
    %v1052 = vand.u32 %v209, 2139095040
    %v1053 = vshrl.u32 %v1052, 23
    %v1054 = vsub.s32 %v1053, 127
    %v1055 = vand.u32 2147483647, %v209
    %v1056 = vand.u32 %v1055, 8388607
    %v1057 = vor.u32 %v1056, 8388608
    %v1058 = vsub.s32 0, %v1057
    %v1059 = vadd.s32 %v1054, 1
    %vm1060 = vcmp.gt.s32.totalorder %v1059, 0
    %v1061 = vsel %vm1060, %v1059, 0
    %v1062 = vshrl.u32 %v1061, 5
    %v1063 = vand.u32 %v1061, 31
    %v1064 = vsub.s32 32, %v1063
    %v1065 = vshrl.u32 683565275, %v1064
    %v1066 = vshll.u32 683565275, %v1063
    %v1067 = vshrl.u32 2475754826, %v1064
    %v1068 = vor.u32 %v1066, %v1067
    %v1069 = vshll.u32 2475754826, %v1063
    %v1070 = vshrl.u32 2131351028, %v1064
    %v1071 = vor.u32 %v1069, %v1070
    %v1072 = vshll.u32 2131351028, %v1063
    %v1073 = vshrl.u32 2102212464, %v1064
    %v1074 = vor.u32 %v1072, %v1073
    %v1075 = vshll.u32 2102212464, %v1063
    %v1076 = vshrl.u32 920167782, %v1064
    %v1077 = vor.u32 %v1075, %v1076
    %v1078 = vshll.u32 920167782, %v1063
    %v1079 = vshrl.u32 1326507024, %v1064
    %v1080 = vor.u32 %v1078, %v1079
    %vm1081 = vcmp.lt.s32.totalorder %v1062, 1
    %vm1082 = vcmp.lt.s32.totalorder %v1062, 2
    %vm1083 = vcmp.lt.s32.totalorder %v1062, 3
    %vm1084 = vcmp.lt.s32.totalorder %v1062, 4
    %v1085 = vsel %vm1081, %v1065, %v1068
    %v1086 = vsel %vm1084, %v1074, 2102212464
    %v1087 = vsel %vm1083, %v1071, %v1086
    %v1088 = vsel %vm1082, %v1085, %v1087
    %v1089 = vsel %vm1081, %v1068, %v1071
    %v1090 = vsel %vm1084, %v1077, 920167782
    %v1091 = vsel %vm1083, %v1074, %v1090
    %v1092 = vsel %vm1082, %v1089, %v1091
    %v1093 = vsel %vm1081, %v1071, %v1074
    %v1094 = vsel %vm1084, %v1080, 1326507024
    %v1095 = vsel %vm1083, %v1077, %v1094
    %v1096 = vsel %vm1082, %v1093, %v1095
    %v1097 = vshll.u32 %v1057, 8
    %v1098 = vmul.u32.u64.compose %v1097, %v1096
    %v1099 = vextract.low.u32 %v1098
    %v1100 = vextract.high.u32 %v1098
    %v1101 = vmul.u32.u64.compose %v1097, %v1092
    %v1102 = vextract.low.u32 %v1101
    %v1103 = vextract.high.u32 %v1101
    %v1104 = vmul.u32 %v1097, %v1088
    %v1105 = vadd.s32 %v1100, %v1102
    %vm1106 = vc.u32 %v1100, %v1102
    %v1107 = vadd.s32 %v1103, 1
    %v1108 = vsel %vm1106, %v1107, %v1103
    %v1109 = vadd.s32 %v1104, %v1108
    %v1110 = vadd.s32 %v1109, 536870912
    %v1111 = vshrl.u32 %v1110, 30
    %v1112 = vshll.u32 %v1111, 30
    %v1113 = vsub.s32 %v1109, %v1112
    %vm1114 = vcmp.lt.s32.totalorder %v1113, 0
    %v1115 = vsub.s32 0, %v1113
    %v1116 = vsel %vm1114, %v1115, %v1113
    %v1117 = vclz %v1116
    %v1118 = vsub.s32 %v1117, 2
    %vm1119 = vcmp.gt.s32.totalorder 0, %v1118
    %v1120 = vsel %vm1119, 0, %v1118
    %v1121 = vsub.s32 32, %v1120
    %v1122 = vshll.u32 %v1113, %v1120
    %v1123 = vshrl.u32 %v1105, %v1121
    %v1124 = vor.u32 %v1122, %v1123
    %v1125 = vsub.s32 4294967266, %v1120
    %v1126 = vadd.s32 %v1125, 127
    %v1127 = vshll.u32 %v1126, 23
    %v1128 = vor.u32 4788187, %v1127
    %v1129 = vand.u32 2147483647, %v1128
    %v1131 = vcvt.s32.f32 %v1124
    %v1132 = vmul.f32 %v1131, %v1129
    %v1133 = vxor.u32 %v1132, 2147483648
    %v1134 = vsel %vm1051, %v1133, %v1132
    %v1135 = vsub.s32 4, %v1111
    %v1136 = vsel %vm1051, %v1135, %v1111
    %v1137 = vsel %vm1050, %v209, %v1134
    %v1138 = vsel %vm1050, 0, %v1136
    %v1139 = vcosq.f32.pop %v1137
    %v1140 = vsinq.f32.pop %v1137
    %vm1141 = vweird.f32 %v209
    %v1142 = vadd.s32 %v1138, 3
    %v1143 = vand.u32 %v1142, 3
    %vm1144 = vcmp.lt.s32.totalorder %v1143, 2
    %vm1145 = vcmp.eq.s32.totalorder %v1143, 0
    %v1146 = vxor.u32 %v1140, 2147483648
    %v1147 = vsel %vm1145, %v1139, %v1146
    %vm1148 = vcmp.eq.s32.totalorder %v1143, 2
    %v1149 = vxor.u32 %v1139, 2147483648
    %v1150 = vsel %vm1148, %v1149, %v1140
    %v1151 = vsel %vm1144, %v1147, %v1150
    %v1152 = vsel %vm1141, nan, %v1151
    %v1153 = vand.u32 2147483647, %v210
    %vm1154 = vcmp.le.f32.partialorder %v1153, 0.7853982
    %vm1155 = vcmp.lt.s32.totalorder %v210, 0
    %v1156 = vand.u32 %v210, 2139095040
    %v1157 = vshrl.u32 %v1156, 23
    %v1158 = vsub.s32 %v1157, 127
    %v1159 = vand.u32 2147483647, %v210
    %v1160 = vand.u32 %v1159, 8388607
    %v1161 = vor.u32 %v1160, 8388608
    %v1162 = vsub.s32 0, %v1161
    %v1163 = vadd.s32 %v1158, 1
    %vm1164 = vcmp.gt.s32.totalorder %v1163, 0
    %v1165 = vsel %vm1164, %v1163, 0
    %v1166 = vshrl.u32 %v1165, 5
    %v1167 = vand.u32 %v1165, 31
    %v1168 = vsub.s32 32, %v1167
    %v1169 = vshrl.u32 683565275, %v1168
    %v1170 = vshll.u32 683565275, %v1167
    %v1171 = vshrl.u32 2475754826, %v1168
    %v1172 = vor.u32 %v1170, %v1171
    %v1173 = vshll.u32 2475754826, %v1167
    %v1174 = vshrl.u32 2131351028, %v1168
    %v1175 = vor.u32 %v1173, %v1174
    %v1176 = vshll.u32 2131351028, %v1167
    %v1177 = vshrl.u32 2102212464, %v1168
    %v1178 = vor.u32 %v1176, %v1177
    %v1179 = vshll.u32 2102212464, %v1167
    %v1180 = vshrl.u32 920167782, %v1168
    %v1181 = vor.u32 %v1179, %v1180
    %v1182 = vshll.u32 920167782, %v1167
    %v1183 = vshrl.u32 1326507024, %v1168
    %v1184 = vor.u32 %v1182, %v1183
    %vm1185 = vcmp.lt.s32.totalorder %v1166, 1
    %vm1186 = vcmp.lt.s32.totalorder %v1166, 2
    %vm1187 = vcmp.lt.s32.totalorder %v1166, 3
    %vm1188 = vcmp.lt.s32.totalorder %v1166, 4
    %v1189 = vsel %vm1185, %v1169, %v1172
    %v1190 = vsel %vm1188, %v1178, 2102212464
    %v1191 = vsel %vm1187, %v1175, %v1190
    %v1192 = vsel %vm1186, %v1189, %v1191
    %v1193 = vsel %vm1185, %v1172, %v1175
    %v1194 = vsel %vm1188, %v1181, 920167782
    %v1195 = vsel %vm1187, %v1178, %v1194
    %v1196 = vsel %vm1186, %v1193, %v1195
    %v1197 = vsel %vm1185, %v1175, %v1178
    %v1198 = vsel %vm1188, %v1184, 1326507024
    %v1199 = vsel %vm1187, %v1181, %v1198
    %v1200 = vsel %vm1186, %v1197, %v1199
    %v1201 = vshll.u32 %v1161, 8
    %v1202 = vmul.u32.u64.compose %v1201, %v1200
    %v1203 = vextract.low.u32 %v1202
    %v1204 = vextract.high.u32 %v1202
    %v1205 = vmul.u32.u64.compose %v1201, %v1196
    %v1206 = vextract.low.u32 %v1205
    %v1207 = vextract.high.u32 %v1205
    %v1208 = vmul.u32 %v1201, %v1192
    %v1209 = vadd.s32 %v1204, %v1206
    %vm1210 = vc.u32 %v1204, %v1206
    %v1211 = vadd.s32 %v1207, 1
    %v1212 = vsel %vm1210, %v1211, %v1207
    %v1213 = vadd.s32 %v1208, %v1212
    %v1214 = vadd.s32 %v1213, 536870912
    %v1215 = vshrl.u32 %v1214, 30
    %v1216 = vshll.u32 %v1215, 30
    %v1217 = vsub.s32 %v1213, %v1216
    %vm1218 = vcmp.lt.s32.totalorder %v1217, 0
    %v1219 = vsub.s32 0, %v1217
    %v1220 = vsel %vm1218, %v1219, %v1217
    %v1221 = vclz %v1220
    %v1222 = vsub.s32 %v1221, 2
    %vm1223 = vcmp.gt.s32.totalorder 0, %v1222
    %v1224 = vsel %vm1223, 0, %v1222
    %v1225 = vsub.s32 32, %v1224
    %v1226 = vshll.u32 %v1217, %v1224
    %v1227 = vshrl.u32 %v1209, %v1225
    %v1228 = vor.u32 %v1226, %v1227
    %v1229 = vsub.s32 4294967266, %v1224
    %v1230 = vadd.s32 %v1229, 127
    %v1231 = vshll.u32 %v1230, 23
    %v1232 = vor.u32 4788187, %v1231
    %v1233 = vand.u32 2147483647, %v1232
    %v1235 = vcvt.s32.f32 %v1228
    %v1236 = vmul.f32 %v1235, %v1233
    %v1237 = vxor.u32 %v1236, 2147483648
    %v1238 = vsel %vm1155, %v1237, %v1236
    %v1239 = vsub.s32 4, %v1215
    %v1240 = vsel %vm1155, %v1239, %v1215
    %v1241 = vsel %vm1154, %v210, %v1238
    %v1242 = vsel %vm1154, 0, %v1240
    %v1243 = vcosq.f32.pop %v1241
    %v1244 = vsinq.f32.pop %v1241
    %vm1245 = vweird.f32 %v210
    %v1246 = vadd.s32 %v1242, 3
    %v1247 = vand.u32 %v1246, 3
    %vm1248 = vcmp.lt.s32.totalorder %v1247, 2
    %vm1249 = vcmp.eq.s32.totalorder %v1247, 0
    %v1250 = vxor.u32 %v1244, 2147483648
    %v1251 = vsel %vm1249, %v1243, %v1250
    %vm1252 = vcmp.eq.s32.totalorder %v1247, 2
    %v1253 = vxor.u32 %v1243, 2147483648
    %v1254 = vsel %vm1252, %v1253, %v1244
    %v1255 = vsel %vm1248, %v1251, %v1254
    %v1256 = vsel %vm1245, nan, %v1255
    %v1257 = vand.u32 2147483647, %v211
    %vm1258 = vcmp.le.f32.partialorder %v1257, 0.7853982
    %vm1259 = vcmp.lt.s32.totalorder %v211, 0
    %v1260 = vand.u32 %v211, 2139095040
    %v1261 = vshrl.u32 %v1260, 23
    %v1262 = vsub.s32 %v1261, 127
    %v1263 = vand.u32 2147483647, %v211
    %v1264 = vand.u32 %v1263, 8388607
    %v1265 = vor.u32 %v1264, 8388608
    %v1266 = vsub.s32 0, %v1265
    %v1267 = vadd.s32 %v1262, 1
    %vm1268 = vcmp.gt.s32.totalorder %v1267, 0
    %v1269 = vsel %vm1268, %v1267, 0
    %v1270 = vshrl.u32 %v1269, 5
    %v1271 = vand.u32 %v1269, 31
    %v1272 = vsub.s32 32, %v1271
    %v1273 = vshrl.u32 683565275, %v1272
    %v1274 = vshll.u32 683565275, %v1271
    %v1275 = vshrl.u32 2475754826, %v1272
    %v1276 = vor.u32 %v1274, %v1275
    %v1277 = vshll.u32 2475754826, %v1271
    %v1278 = vshrl.u32 2131351028, %v1272
    %v1279 = vor.u32 %v1277, %v1278
    %v1280 = vshll.u32 2131351028, %v1271
    %v1281 = vshrl.u32 2102212464, %v1272
    %v1282 = vor.u32 %v1280, %v1281
    %v1283 = vshll.u32 2102212464, %v1271
    %v1284 = vshrl.u32 920167782, %v1272
    %v1285 = vor.u32 %v1283, %v1284
    %v1286 = vshll.u32 920167782, %v1271
    %v1287 = vshrl.u32 1326507024, %v1272
    %v1288 = vor.u32 %v1286, %v1287
    %vm1289 = vcmp.lt.s32.totalorder %v1270, 1
    %vm1290 = vcmp.lt.s32.totalorder %v1270, 2
    %vm1291 = vcmp.lt.s32.totalorder %v1270, 3
    %vm1292 = vcmp.lt.s32.totalorder %v1270, 4
    %v1293 = vsel %vm1289, %v1273, %v1276
    %v1294 = vsel %vm1292, %v1282, 2102212464
    %v1295 = vsel %vm1291, %v1279, %v1294
    %v1296 = vsel %vm1290, %v1293, %v1295
    %v1297 = vsel %vm1289, %v1276, %v1279
    %v1298 = vsel %vm1292, %v1285, 920167782
    %v1299 = vsel %vm1291, %v1282, %v1298
    %v1300 = vsel %vm1290, %v1297, %v1299
    %v1301 = vsel %vm1289, %v1279, %v1282
    %v1302 = vsel %vm1292, %v1288, 1326507024
    %v1303 = vsel %vm1291, %v1285, %v1302
    %v1304 = vsel %vm1290, %v1301, %v1303
    %v1305 = vshll.u32 %v1265, 8
    %v1306 = vmul.u32.u64.compose %v1305, %v1304
    %v1307 = vextract.low.u32 %v1306
    %v1308 = vextract.high.u32 %v1306
    %v1309 = vmul.u32.u64.compose %v1305, %v1300
    %v1310 = vextract.low.u32 %v1309
    %v1311 = vextract.high.u32 %v1309
    %v1312 = vmul.u32 %v1305, %v1296
    %v1313 = vadd.s32 %v1308, %v1310
    %vm1314 = vc.u32 %v1308, %v1310
    %v1315 = vadd.s32 %v1311, 1
    %v1316 = vsel %vm1314, %v1315, %v1311
    %v1317 = vadd.s32 %v1312, %v1316
    %v1318 = vadd.s32 %v1317, 536870912
    %v1319 = vshrl.u32 %v1318, 30
    %v1320 = vshll.u32 %v1319, 30
    %v1321 = vsub.s32 %v1317, %v1320
    %vm1322 = vcmp.lt.s32.totalorder %v1321, 0
    %v1323 = vsub.s32 0, %v1321
    %v1324 = vsel %vm1322, %v1323, %v1321
    %v1325 = vclz %v1324
    %v1326 = vsub.s32 %v1325, 2
    %vm1327 = vcmp.gt.s32.totalorder 0, %v1326
    %v1328 = vsel %vm1327, 0, %v1326
    %v1329 = vsub.s32 32, %v1328
    %v1330 = vshll.u32 %v1321, %v1328
    %v1331 = vshrl.u32 %v1313, %v1329
    %v1332 = vor.u32 %v1330, %v1331
    %v1333 = vsub.s32 4294967266, %v1328
    %v1334 = vadd.s32 %v1333, 127
    %v1335 = vshll.u32 %v1334, 23
    %v1336 = vor.u32 4788187, %v1335
    %v1337 = vand.u32 2147483647, %v1336
    %v1339 = vcvt.s32.f32 %v1332
    %v1340 = vmul.f32 %v1339, %v1337
    %v1341 = vxor.u32 %v1340, 2147483648
    %v1342 = vsel %vm1259, %v1341, %v1340
    %v1343 = vsub.s32 4, %v1319
    %v1344 = vsel %vm1259, %v1343, %v1319
    %v1345 = vsel %vm1258, %v211, %v1342
    %v1346 = vsel %vm1258, 0, %v1344
    %v1347 = vcosq.f32.pop %v1345
    %v1348 = vsinq.f32.pop %v1345
    %vm1349 = vweird.f32 %v211
    %v1350 = vadd.s32 %v1346, 3
    %v1351 = vand.u32 %v1350, 3
    %vm1352 = vcmp.lt.s32.totalorder %v1351, 2
    %vm1353 = vcmp.eq.s32.totalorder %v1351, 0
    %v1354 = vxor.u32 %v1348, 2147483648
    %v1355 = vsel %vm1353, %v1347, %v1354
    %vm1356 = vcmp.eq.s32.totalorder %v1351, 2
    %v1357 = vxor.u32 %v1347, 2147483648
    %v1358 = vsel %vm1356, %v1357, %v1348
    %v1359 = vsel %vm1352, %v1355, %v1358
    %v1360 = vsel %vm1349, nan, %v1359
    %v1361 = vand.u32 2147483647, %v212
    %vm1362 = vcmp.le.f32.partialorder %v1361, 0.7853982
    %vm1363 = vcmp.lt.s32.totalorder %v212, 0
    %v1364 = vand.u32 %v212, 2139095040
    %v1365 = vshrl.u32 %v1364, 23
    %v1366 = vsub.s32 %v1365, 127
    %v1367 = vand.u32 2147483647, %v212
    %v1368 = vand.u32 %v1367, 8388607
    %v1369 = vor.u32 %v1368, 8388608
    %v1370 = vsub.s32 0, %v1369
    %v1371 = vadd.s32 %v1366, 1
    %vm1372 = vcmp.gt.s32.totalorder %v1371, 0
    %v1373 = vsel %vm1372, %v1371, 0
    %v1374 = vshrl.u32 %v1373, 5
    %v1375 = vand.u32 %v1373, 31
    %v1376 = vsub.s32 32, %v1375
    %v1377 = vshrl.u32 683565275, %v1376
    %v1378 = vshll.u32 683565275, %v1375
    %v1379 = vshrl.u32 2475754826, %v1376
    %v1380 = vor.u32 %v1378, %v1379
    %v1381 = vshll.u32 2475754826, %v1375
    %v1382 = vshrl.u32 2131351028, %v1376
    %v1383 = vor.u32 %v1381, %v1382
    %v1384 = vshll.u32 2131351028, %v1375
    %v1385 = vshrl.u32 2102212464, %v1376
    %v1386 = vor.u32 %v1384, %v1385
    %v1387 = vshll.u32 2102212464, %v1375
    %v1388 = vshrl.u32 920167782, %v1376
    %v1389 = vor.u32 %v1387, %v1388
    %v1390 = vshll.u32 920167782, %v1375
    %v1391 = vshrl.u32 1326507024, %v1376
    %v1392 = vor.u32 %v1390, %v1391
    %vm1393 = vcmp.lt.s32.totalorder %v1374, 1
    %vm1394 = vcmp.lt.s32.totalorder %v1374, 2
    %vm1395 = vcmp.lt.s32.totalorder %v1374, 3
    %vm1396 = vcmp.lt.s32.totalorder %v1374, 4
    %v1397 = vsel %vm1393, %v1377, %v1380
    %v1398 = vsel %vm1396, %v1386, 2102212464
    %v1399 = vsel %vm1395, %v1383, %v1398
    %v1400 = vsel %vm1394, %v1397, %v1399
    %v1401 = vsel %vm1393, %v1380, %v1383
    %v1402 = vsel %vm1396, %v1389, 920167782
    %v1403 = vsel %vm1395, %v1386, %v1402
    %v1404 = vsel %vm1394, %v1401, %v1403
    %v1405 = vsel %vm1393, %v1383, %v1386
    %v1406 = vsel %vm1396, %v1392, 1326507024
    %v1407 = vsel %vm1395, %v1389, %v1406
    %v1408 = vsel %vm1394, %v1405, %v1407
    %v1409 = vshll.u32 %v1369, 8
    %v1410 = vmul.u32.u64.compose %v1409, %v1408
    %v1411 = vextract.low.u32 %v1410
    %v1412 = vextract.high.u32 %v1410
    %v1413 = vmul.u32.u64.compose %v1409, %v1404
    %v1414 = vextract.low.u32 %v1413
    %v1415 = vextract.high.u32 %v1413
    %v1416 = vmul.u32 %v1409, %v1400
    %v1417 = vadd.s32 %v1412, %v1414
    %vm1418 = vc.u32 %v1412, %v1414
    %v1419 = vadd.s32 %v1415, 1
    %v1420 = vsel %vm1418, %v1419, %v1415
    %v1421 = vadd.s32 %v1416, %v1420
    %v1422 = vadd.s32 %v1421, 536870912
    %v1423 = vshrl.u32 %v1422, 30
    %v1424 = vshll.u32 %v1423, 30
    %v1425 = vsub.s32 %v1421, %v1424
    %vm1426 = vcmp.lt.s32.totalorder %v1425, 0
    %v1427 = vsub.s32 0, %v1425
    %v1428 = vsel %vm1426, %v1427, %v1425
    %v1429 = vclz %v1428
    %v1430 = vsub.s32 %v1429, 2
    %vm1431 = vcmp.gt.s32.totalorder 0, %v1430
    %v1432 = vsel %vm1431, 0, %v1430
    %v1433 = vsub.s32 32, %v1432
    %v1434 = vshll.u32 %v1425, %v1432
    %v1435 = vshrl.u32 %v1417, %v1433
    %v1436 = vor.u32 %v1434, %v1435
    %v1437 = vsub.s32 4294967266, %v1432
    %v1438 = vadd.s32 %v1437, 127
    %v1439 = vshll.u32 %v1438, 23
    %v1440 = vor.u32 4788187, %v1439
    %v1441 = vand.u32 2147483647, %v1440
    %v1443 = vcvt.s32.f32 %v1436
    %v1444 = vmul.f32 %v1443, %v1441
    %v1445 = vxor.u32 %v1444, 2147483648
    %v1446 = vsel %vm1363, %v1445, %v1444
    %v1447 = vsub.s32 4, %v1423
    %v1448 = vsel %vm1363, %v1447, %v1423
    %v1449 = vsel %vm1362, %v212, %v1446
    %v1450 = vsel %vm1362, 0, %v1448
    %v1451 = vcosq.f32.pop %v1449
    %v1452 = vsinq.f32.pop %v1449
    %vm1453 = vweird.f32 %v212
    %v1454 = vadd.s32 %v1450, 3
    %v1455 = vand.u32 %v1454, 3
    %vm1456 = vcmp.lt.s32.totalorder %v1455, 2
    %vm1457 = vcmp.eq.s32.totalorder %v1455, 0
    %v1458 = vxor.u32 %v1452, 2147483648
    %v1459 = vsel %vm1457, %v1451, %v1458
    %vm1460 = vcmp.eq.s32.totalorder %v1455, 2
    %v1461 = vxor.u32 %v1451, 2147483648
    %v1462 = vsel %vm1460, %v1461, %v1452
    %v1463 = vsel %vm1456, %v1459, %v1462
    %v1464 = vsel %vm1453, nan, %v1463
    %v1465 = vand.u32 2147483647, %v213
    %vm1466 = vcmp.le.f32.partialorder %v1465, 0.7853982
    %vm1467 = vcmp.lt.s32.totalorder %v213, 0
    %v1468 = vand.u32 %v213, 2139095040
    %v1469 = vshrl.u32 %v1468, 23
    %v1470 = vsub.s32 %v1469, 127
    %v1471 = vand.u32 2147483647, %v213
    %v1472 = vand.u32 %v1471, 8388607
    %v1473 = vor.u32 %v1472, 8388608
    %v1474 = vsub.s32 0, %v1473
    %v1475 = vadd.s32 %v1470, 1
    %vm1476 = vcmp.gt.s32.totalorder %v1475, 0
    %v1477 = vsel %vm1476, %v1475, 0
    %v1478 = vshrl.u32 %v1477, 5
    %v1479 = vand.u32 %v1477, 31
    %v1480 = vsub.s32 32, %v1479
    %v1481 = vshrl.u32 683565275, %v1480
    %v1482 = vshll.u32 683565275, %v1479
    %v1483 = vshrl.u32 2475754826, %v1480
    %v1484 = vor.u32 %v1482, %v1483
    %v1485 = vshll.u32 2475754826, %v1479
    %v1486 = vshrl.u32 2131351028, %v1480
    %v1487 = vor.u32 %v1485, %v1486
    %v1488 = vshll.u32 2131351028, %v1479
    %v1489 = vshrl.u32 2102212464, %v1480
    %v1490 = vor.u32 %v1488, %v1489
    %v1491 = vshll.u32 2102212464, %v1479
    %v1492 = vshrl.u32 920167782, %v1480
    %v1493 = vor.u32 %v1491, %v1492
    %v1494 = vshll.u32 920167782, %v1479
    %v1495 = vshrl.u32 1326507024, %v1480
    %v1496 = vor.u32 %v1494, %v1495
    %vm1497 = vcmp.lt.s32.totalorder %v1478, 1
    %vm1498 = vcmp.lt.s32.totalorder %v1478, 2
    %vm1499 = vcmp.lt.s32.totalorder %v1478, 3
    %vm1500 = vcmp.lt.s32.totalorder %v1478, 4
    %v1501 = vsel %vm1497, %v1481, %v1484
    %v1502 = vsel %vm1500, %v1490, 2102212464
    %v1503 = vsel %vm1499, %v1487, %v1502
    %v1504 = vsel %vm1498, %v1501, %v1503
    %v1505 = vsel %vm1497, %v1484, %v1487
    %v1506 = vsel %vm1500, %v1493, 920167782
    %v1507 = vsel %vm1499, %v1490, %v1506
    %v1508 = vsel %vm1498, %v1505, %v1507
    %v1509 = vsel %vm1497, %v1487, %v1490
    %v1510 = vsel %vm1500, %v1496, 1326507024
    %v1511 = vsel %vm1499, %v1493, %v1510
    %v1512 = vsel %vm1498, %v1509, %v1511
    %v1513 = vshll.u32 %v1473, 8
    %v1514 = vmul.u32.u64.compose %v1513, %v1512
    %v1515 = vextract.low.u32 %v1514
    %v1516 = vextract.high.u32 %v1514
    %v1517 = vmul.u32.u64.compose %v1513, %v1508
    %v1518 = vextract.low.u32 %v1517
    %v1519 = vextract.high.u32 %v1517
    %v1520 = vmul.u32 %v1513, %v1504
    %v1521 = vadd.s32 %v1516, %v1518
    %vm1522 = vc.u32 %v1516, %v1518
    %v1523 = vadd.s32 %v1519, 1
    %v1524 = vsel %vm1522, %v1523, %v1519
    %v1525 = vadd.s32 %v1520, %v1524
    %v1526 = vadd.s32 %v1525, 536870912
    %v1527 = vshrl.u32 %v1526, 30
    %v1528 = vshll.u32 %v1527, 30
    %v1529 = vsub.s32 %v1525, %v1528
    %vm1530 = vcmp.lt.s32.totalorder %v1529, 0
    %v1531 = vsub.s32 0, %v1529
    %v1532 = vsel %vm1530, %v1531, %v1529
    %v1533 = vclz %v1532
    %v1534 = vsub.s32 %v1533, 2
    %vm1535 = vcmp.gt.s32.totalorder 0, %v1534
    %v1536 = vsel %vm1535, 0, %v1534
    %v1537 = vsub.s32 32, %v1536
    %v1538 = vshll.u32 %v1529, %v1536
    %v1539 = vshrl.u32 %v1521, %v1537
    %v1540 = vor.u32 %v1538, %v1539
    %v1541 = vsub.s32 4294967266, %v1536
    %v1542 = vadd.s32 %v1541, 127
    %v1543 = vshll.u32 %v1542, 23
    %v1544 = vor.u32 4788187, %v1543
    %v1545 = vand.u32 2147483647, %v1544
    %v1547 = vcvt.s32.f32 %v1540
    %v1548 = vmul.f32 %v1547, %v1545
    %v1549 = vxor.u32 %v1548, 2147483648
    %v1550 = vsel %vm1467, %v1549, %v1548
    %v1551 = vsub.s32 4, %v1527
    %v1552 = vsel %vm1467, %v1551, %v1527
    %v1553 = vsel %vm1466, %v213, %v1550
    %v1554 = vsel %vm1466, 0, %v1552
    %v1555 = vcosq.f32.pop %v1553
    %v1556 = vsinq.f32.pop %v1553
    %vm1557 = vweird.f32 %v213
    %v1558 = vadd.s32 %v1554, 3
    %v1559 = vand.u32 %v1558, 3
    %vm1560 = vcmp.lt.s32.totalorder %v1559, 2
    %vm1561 = vcmp.eq.s32.totalorder %v1559, 0
    %v1562 = vxor.u32 %v1556, 2147483648
    %v1563 = vsel %vm1561, %v1555, %v1562
    %vm1564 = vcmp.eq.s32.totalorder %v1559, 2
    %v1565 = vxor.u32 %v1555, 2147483648
    %v1566 = vsel %vm1564, %v1565, %v1556
    %v1567 = vsel %vm1560, %v1563, %v1566
    %v1568 = vsel %vm1557, nan, %v1567
    %v1569 = vand.u32 2147483647, %v214
    %vm1570 = vcmp.le.f32.partialorder %v1569, 0.7853982
    %vm1571 = vcmp.lt.s32.totalorder %v214, 0
    %v1572 = vand.u32 %v214, 2139095040
    %v1573 = vshrl.u32 %v1572, 23
    %v1574 = vsub.s32 %v1573, 127
    %v1575 = vand.u32 2147483647, %v214
    %v1576 = vand.u32 %v1575, 8388607
    %v1577 = vor.u32 %v1576, 8388608
    %v1578 = vsub.s32 0, %v1577
    %v1579 = vadd.s32 %v1574, 1
    %vm1580 = vcmp.gt.s32.totalorder %v1579, 0
    %v1581 = vsel %vm1580, %v1579, 0
    %v1582 = vshrl.u32 %v1581, 5
    %v1583 = vand.u32 %v1581, 31
    %v1584 = vsub.s32 32, %v1583
    %v1585 = vshrl.u32 683565275, %v1584
    %v1586 = vshll.u32 683565275, %v1583
    %v1587 = vshrl.u32 2475754826, %v1584
    %v1588 = vor.u32 %v1586, %v1587
    %v1589 = vshll.u32 2475754826, %v1583
    %v1590 = vshrl.u32 2131351028, %v1584
    %v1591 = vor.u32 %v1589, %v1590
    %v1592 = vshll.u32 2131351028, %v1583
    %v1593 = vshrl.u32 2102212464, %v1584
    %v1594 = vor.u32 %v1592, %v1593
    %v1595 = vshll.u32 2102212464, %v1583
    %v1596 = vshrl.u32 920167782, %v1584
    %v1597 = vor.u32 %v1595, %v1596
    %v1598 = vshll.u32 920167782, %v1583
    %v1599 = vshrl.u32 1326507024, %v1584
    %v1600 = vor.u32 %v1598, %v1599
    %vm1601 = vcmp.lt.s32.totalorder %v1582, 1
    %vm1602 = vcmp.lt.s32.totalorder %v1582, 2
    %vm1603 = vcmp.lt.s32.totalorder %v1582, 3
    %vm1604 = vcmp.lt.s32.totalorder %v1582, 4
    %v1605 = vsel %vm1601, %v1585, %v1588
    %v1606 = vsel %vm1604, %v1594, 2102212464
    %v1607 = vsel %vm1603, %v1591, %v1606
    %v1608 = vsel %vm1602, %v1605, %v1607
    %v1609 = vsel %vm1601, %v1588, %v1591
    %v1610 = vsel %vm1604, %v1597, 920167782
    %v1611 = vsel %vm1603, %v1594, %v1610
    %v1612 = vsel %vm1602, %v1609, %v1611
    %v1613 = vsel %vm1601, %v1591, %v1594
    %v1614 = vsel %vm1604, %v1600, 1326507024
    %v1615 = vsel %vm1603, %v1597, %v1614
    %v1616 = vsel %vm1602, %v1613, %v1615
    %v1617 = vshll.u32 %v1577, 8
    %v1618 = vmul.u32.u64.compose %v1617, %v1616
    %v1619 = vextract.low.u32 %v1618
    %v1620 = vextract.high.u32 %v1618
    %v1621 = vmul.u32.u64.compose %v1617, %v1612
    %v1622 = vextract.low.u32 %v1621
    %v1623 = vextract.high.u32 %v1621
    %v1624 = vmul.u32 %v1617, %v1608
    %v1625 = vadd.s32 %v1620, %v1622
    %vm1626 = vc.u32 %v1620, %v1622
    %v1627 = vadd.s32 %v1623, 1
    %v1628 = vsel %vm1626, %v1627, %v1623
    %v1629 = vadd.s32 %v1624, %v1628
    %v1630 = vadd.s32 %v1629, 536870912
    %v1631 = vshrl.u32 %v1630, 30
    %v1632 = vshll.u32 %v1631, 30
    %v1633 = vsub.s32 %v1629, %v1632
    %vm1634 = vcmp.lt.s32.totalorder %v1633, 0
    %v1635 = vsub.s32 0, %v1633
    %v1636 = vsel %vm1634, %v1635, %v1633
    %v1637 = vclz %v1636
    %v1638 = vsub.s32 %v1637, 2
    %vm1639 = vcmp.gt.s32.totalorder 0, %v1638
    %v1640 = vsel %vm1639, 0, %v1638
    %v1641 = vsub.s32 32, %v1640
    %v1642 = vshll.u32 %v1633, %v1640
    %v1643 = vshrl.u32 %v1625, %v1641
    %v1644 = vor.u32 %v1642, %v1643
    %v1645 = vsub.s32 4294967266, %v1640
    %v1646 = vadd.s32 %v1645, 127
    %v1647 = vshll.u32 %v1646, 23
    %v1648 = vor.u32 4788187, %v1647
    %v1649 = vand.u32 2147483647, %v1648
    %v1651 = vcvt.s32.f32 %v1644
    %v1652 = vmul.f32 %v1651, %v1649
    %v1653 = vxor.u32 %v1652, 2147483648
    %v1654 = vsel %vm1571, %v1653, %v1652
    %v1655 = vsub.s32 4, %v1631
    %v1656 = vsel %vm1571, %v1655, %v1631
    %v1657 = vsel %vm1570, %v214, %v1654
    %v1658 = vsel %vm1570, 0, %v1656
    %v1659 = vcosq.f32.pop %v1657
    %v1660 = vsinq.f32.pop %v1657
    %vm1661 = vweird.f32 %v214
    %v1662 = vadd.s32 %v1658, 3
    %v1663 = vand.u32 %v1662, 3
    %vm1664 = vcmp.lt.s32.totalorder %v1663, 2
    %vm1665 = vcmp.eq.s32.totalorder %v1663, 0
    %v1666 = vxor.u32 %v1660, 2147483648
    %v1667 = vsel %vm1665, %v1659, %v1666
    %vm1668 = vcmp.eq.s32.totalorder %v1663, 2
    %v1669 = vxor.u32 %v1659, 2147483648
    %v1670 = vsel %vm1668, %v1669, %v1660
    %v1671 = vsel %vm1664, %v1667, %v1670
    %v1672 = vsel %vm1661, nan, %v1671
    %v1673 = vand.u32 2147483647, %v215
    %vm1674 = vcmp.le.f32.partialorder %v1673, 0.7853982
    %vm1675 = vcmp.lt.s32.totalorder %v215, 0
    %v1676 = vand.u32 %v215, 2139095040
    %v1677 = vshrl.u32 %v1676, 23
    %v1678 = vsub.s32 %v1677, 127
    %v1679 = vand.u32 2147483647, %v215
    %v1680 = vand.u32 %v1679, 8388607
    %v1681 = vor.u32 %v1680, 8388608
    %v1682 = vsub.s32 0, %v1681
    %v1683 = vadd.s32 %v1678, 1
    %vm1684 = vcmp.gt.s32.totalorder %v1683, 0
    %v1685 = vsel %vm1684, %v1683, 0
    %v1686 = vshrl.u32 %v1685, 5
    %v1687 = vand.u32 %v1685, 31
    %v1688 = vsub.s32 32, %v1687
    %v1689 = vshrl.u32 683565275, %v1688
    %v1690 = vshll.u32 683565275, %v1687
    %v1691 = vshrl.u32 2475754826, %v1688
    %v1692 = vor.u32 %v1690, %v1691
    %v1693 = vshll.u32 2475754826, %v1687
    %v1694 = vshrl.u32 2131351028, %v1688
    %v1695 = vor.u32 %v1693, %v1694
    %v1696 = vshll.u32 2131351028, %v1687
    %v1697 = vshrl.u32 2102212464, %v1688
    %v1698 = vor.u32 %v1696, %v1697
    %v1699 = vshll.u32 2102212464, %v1687
    %v1700 = vshrl.u32 920167782, %v1688
    %v1701 = vor.u32 %v1699, %v1700
    %v1702 = vshll.u32 920167782, %v1687
    %v1703 = vshrl.u32 1326507024, %v1688
    %v1704 = vor.u32 %v1702, %v1703
    %vm1705 = vcmp.lt.s32.totalorder %v1686, 1
    %vm1706 = vcmp.lt.s32.totalorder %v1686, 2
    %vm1707 = vcmp.lt.s32.totalorder %v1686, 3
    %vm1708 = vcmp.lt.s32.totalorder %v1686, 4
    %v1709 = vsel %vm1705, %v1689, %v1692
    %v1710 = vsel %vm1708, %v1698, 2102212464
    %v1711 = vsel %vm1707, %v1695, %v1710
    %v1712 = vsel %vm1706, %v1709, %v1711
    %v1713 = vsel %vm1705, %v1692, %v1695
    %v1714 = vsel %vm1708, %v1701, 920167782
    %v1715 = vsel %vm1707, %v1698, %v1714
    %v1716 = vsel %vm1706, %v1713, %v1715
    %v1717 = vsel %vm1705, %v1695, %v1698
    %v1718 = vsel %vm1708, %v1704, 1326507024
    %v1719 = vsel %vm1707, %v1701, %v1718
    %v1720 = vsel %vm1706, %v1717, %v1719
    %v1721 = vshll.u32 %v1681, 8
    %v1722 = vmul.u32.u64.compose %v1721, %v1720
    %v1723 = vextract.low.u32 %v1722
    %v1724 = vextract.high.u32 %v1722
    %v1725 = vmul.u32.u64.compose %v1721, %v1716
    %v1726 = vextract.low.u32 %v1725
    %v1727 = vextract.high.u32 %v1725
    %v1728 = vmul.u32 %v1721, %v1712
    %v1729 = vadd.s32 %v1724, %v1726
    %vm1730 = vc.u32 %v1724, %v1726
    %v1731 = vadd.s32 %v1727, 1
    %v1732 = vsel %vm1730, %v1731, %v1727
    %v1733 = vadd.s32 %v1728, %v1732
    %v1734 = vadd.s32 %v1733, 536870912
    %v1735 = vshrl.u32 %v1734, 30
    %v1736 = vshll.u32 %v1735, 30
    %v1737 = vsub.s32 %v1733, %v1736
    %vm1738 = vcmp.lt.s32.totalorder %v1737, 0
    %v1739 = vsub.s32 0, %v1737
    %v1740 = vsel %vm1738, %v1739, %v1737
    %v1741 = vclz %v1740
    %v1742 = vsub.s32 %v1741, 2
    %vm1743 = vcmp.gt.s32.totalorder 0, %v1742
    %v1744 = vsel %vm1743, 0, %v1742
    %v1745 = vsub.s32 32, %v1744
    %v1746 = vshll.u32 %v1737, %v1744
    %v1747 = vshrl.u32 %v1729, %v1745
    %v1748 = vor.u32 %v1746, %v1747
    %v1749 = vsub.s32 4294967266, %v1744
    %v1750 = vadd.s32 %v1749, 127
    %v1751 = vshll.u32 %v1750, 23
    %v1752 = vor.u32 4788187, %v1751
    %v1753 = vand.u32 2147483647, %v1752
    %v1755 = vcvt.s32.f32 %v1748
    %v1756 = vmul.f32 %v1755, %v1753
    %v1757 = vxor.u32 %v1756, 2147483648
    %v1758 = vsel %vm1675, %v1757, %v1756
    %v1759 = vsub.s32 4, %v1735
    %v1760 = vsel %vm1675, %v1759, %v1735
    %v1761 = vsel %vm1674, %v215, %v1758
    %v1762 = vsel %vm1674, 0, %v1760
    %v1763 = vcosq.f32.pop %v1761
    %v1764 = vsinq.f32.pop %v1761
    %vm1765 = vweird.f32 %v215
    %v1766 = vadd.s32 %v1762, 3
    %v1767 = vand.u32 %v1766, 3
    %vm1768 = vcmp.lt.s32.totalorder %v1767, 2
    %vm1769 = vcmp.eq.s32.totalorder %v1767, 0
    %v1770 = vxor.u32 %v1764, 2147483648
    %v1771 = vsel %vm1769, %v1763, %v1770
    %vm1772 = vcmp.eq.s32.totalorder %v1767, 2
    %v1773 = vxor.u32 %v1763, 2147483648
    %v1774 = vsel %vm1772, %v1773, %v1764
    %v1775 = vsel %vm1768, %v1771, %v1774
    %v1776 = vsel %vm1765, nan, %v1775
    %v1777 = vand.u32 2147483647, %v216
    %vm1778 = vcmp.le.f32.partialorder %v1777, 0.7853982
    %vm1779 = vcmp.lt.s32.totalorder %v216, 0
    %v1780 = vand.u32 %v216, 2139095040
    %v1781 = vshrl.u32 %v1780, 23
    %v1782 = vsub.s32 %v1781, 127
    %v1783 = vand.u32 2147483647, %v216
    %v1784 = vand.u32 %v1783, 8388607
    %v1785 = vor.u32 %v1784, 8388608
    %v1786 = vsub.s32 0, %v1785
    %v1787 = vadd.s32 %v1782, 1
    %vm1788 = vcmp.gt.s32.totalorder %v1787, 0
    %v1789 = vsel %vm1788, %v1787, 0
    %v1790 = vshrl.u32 %v1789, 5
    %v1791 = vand.u32 %v1789, 31
    %v1792 = vsub.s32 32, %v1791
    %v1793 = vshrl.u32 683565275, %v1792
    %v1794 = vshll.u32 683565275, %v1791
    %v1795 = vshrl.u32 2475754826, %v1792
    %v1796 = vor.u32 %v1794, %v1795
    %v1797 = vshll.u32 2475754826, %v1791
    %v1798 = vshrl.u32 2131351028, %v1792
    %v1799 = vor.u32 %v1797, %v1798
    %v1800 = vshll.u32 2131351028, %v1791
    %v1801 = vshrl.u32 2102212464, %v1792
    %v1802 = vor.u32 %v1800, %v1801
    %v1803 = vshll.u32 2102212464, %v1791
    %v1804 = vshrl.u32 920167782, %v1792
    %v1805 = vor.u32 %v1803, %v1804
    %v1806 = vshll.u32 920167782, %v1791
    %v1807 = vshrl.u32 1326507024, %v1792
    %v1808 = vor.u32 %v1806, %v1807
    %vm1809 = vcmp.lt.s32.totalorder %v1790, 1
    %vm1810 = vcmp.lt.s32.totalorder %v1790, 2
    %vm1811 = vcmp.lt.s32.totalorder %v1790, 3
    %vm1812 = vcmp.lt.s32.totalorder %v1790, 4
    %v1813 = vsel %vm1809, %v1793, %v1796
    %v1814 = vsel %vm1812, %v1802, 2102212464
    %v1815 = vsel %vm1811, %v1799, %v1814
    %v1816 = vsel %vm1810, %v1813, %v1815
    %v1817 = vsel %vm1809, %v1796, %v1799
    %v1818 = vsel %vm1812, %v1805, 920167782
    %v1819 = vsel %vm1811, %v1802, %v1818
    %v1820 = vsel %vm1810, %v1817, %v1819
    %v1821 = vsel %vm1809, %v1799, %v1802
    %v1822 = vsel %vm1812, %v1808, 1326507024
    %v1823 = vsel %vm1811, %v1805, %v1822
    %v1824 = vsel %vm1810, %v1821, %v1823
    %v1825 = vshll.u32 %v1785, 8
    %v1826 = vmul.u32.u64.compose %v1825, %v1824
    %v1827 = vextract.low.u32 %v1826
    %v1828 = vextract.high.u32 %v1826
    %v1829 = vmul.u32.u64.compose %v1825, %v1820
    %v1830 = vextract.low.u32 %v1829
    %v1831 = vextract.high.u32 %v1829
    %v1832 = vmul.u32 %v1825, %v1816
    %v1833 = vadd.s32 %v1828, %v1830
    %vm1834 = vc.u32 %v1828, %v1830
    %v1835 = vadd.s32 %v1831, 1
    %v1836 = vsel %vm1834, %v1835, %v1831
    %v1837 = vadd.s32 %v1832, %v1836
    %v1838 = vadd.s32 %v1837, 536870912
    %v1839 = vshrl.u32 %v1838, 30
    %v1840 = vshll.u32 %v1839, 30
    %v1841 = vsub.s32 %v1837, %v1840
    %vm1842 = vcmp.lt.s32.totalorder %v1841, 0
    %v1843 = vsub.s32 0, %v1841
    %v1844 = vsel %vm1842, %v1843, %v1841
    %v1845 = vclz %v1844
    %v1846 = vsub.s32 %v1845, 2
    %vm1847 = vcmp.gt.s32.totalorder 0, %v1846
    %v1848 = vsel %vm1847, 0, %v1846
    %v1849 = vsub.s32 32, %v1848
    %v1850 = vshll.u32 %v1841, %v1848
    %v1851 = vshrl.u32 %v1833, %v1849
    %v1852 = vor.u32 %v1850, %v1851
    %v1853 = vsub.s32 4294967266, %v1848
    %v1854 = vadd.s32 %v1853, 127
    %v1855 = vshll.u32 %v1854, 23
    %v1856 = vor.u32 4788187, %v1855
    %v1857 = vand.u32 2147483647, %v1856
    %v1859 = vcvt.s32.f32 %v1852
    %v1860 = vmul.f32 %v1859, %v1857
    %v1861 = vxor.u32 %v1860, 2147483648
    %v1862 = vsel %vm1779, %v1861, %v1860
    %v1863 = vsub.s32 4, %v1839
    %v1864 = vsel %vm1779, %v1863, %v1839
    %v1865 = vsel %vm1778, %v216, %v1862
    %v1866 = vsel %vm1778, 0, %v1864
    %v1867 = vcosq.f32.pop %v1865
    %v1868 = vsinq.f32.pop %v1865
    %vm1869 = vweird.f32 %v216
    %v1870 = vadd.s32 %v1866, 3
    %v1871 = vand.u32 %v1870, 3
    %vm1872 = vcmp.lt.s32.totalorder %v1871, 2
    %vm1873 = vcmp.eq.s32.totalorder %v1871, 0
    %v1874 = vxor.u32 %v1868, 2147483648
    %v1875 = vsel %vm1873, %v1867, %v1874
    %vm1876 = vcmp.eq.s32.totalorder %v1871, 2
    %v1877 = vxor.u32 %v1867, 2147483648
    %v1878 = vsel %vm1876, %v1877, %v1868
    %v1879 = vsel %vm1872, %v1875, %v1878
    %v1880 = vsel %vm1869, nan, %v1879
    %1881 = vst [vmem:[#allocation2] sm:$0xff] %v320
    %1882 = vst [vmem:[#allocation2 + $0x8] sm:$0xff] %v424
    %1883 = vst [vmem:[#allocation2 + $0x10] sm:$0xff] %v528
    %1884 = vst [vmem:[#allocation2 + $0x18] sm:$0xff] %v632
    %1885 = vst [vmem:[#allocation2 + $0x20] sm:$0xff] %v736
    %1886 = vst [vmem:[#allocation2 + $0x28] sm:$0xff] %v840
    %1887 = vst [vmem:[#allocation2 + $0x30] sm:$0xff] %v944
    %1888 = vst [vmem:[#allocation2 + $0x38] sm:$0xff] %v1048
    %1889 = vst [vmem:[#allocation2 + $0x40] sm:$0xff] %v1152
    %1890 = vst [vmem:[#allocation2 + $0x48] sm:$0xff] %v1256
    %1891 = vst [vmem:[#allocation2 + $0x50] sm:$0xff] %v1360
    %1892 = vst [vmem:[#allocation2 + $0x58] sm:$0xff] %v1464
    %1893 = vst [vmem:[#allocation2 + $0x60] sm:$0xff] %v1568
    %1894 = vst [vmem:[#allocation2 + $0x68] sm:$0xff] %v1672
    %1895 = vst [vmem:[#allocation2 + $0x70] sm:$0xff] %v1776
    %1896 = vst [vmem:[#allocation2 + $0x78] sm:$0xff] %v1880
    // Predicated region
    $region14: #{tpu_custom_call.1} parent=1 // pred_check
      _
    $region15: #{tpu_custom_call.1} parent=1 // pred_check_branch
      %1898 = sbr.rel (0) target = $region17
    $region16: #{tpu_custom_call.1} parent=1 // pred_region
      %s1900 = ssub.s32 2048, 2048
      %1901 = vsyncadd [#allocation3], %s1900
      %s1902 = sshll.u32 [#allocation2], 4
      %s1903 = int_to_ptr.vmem [resolvable:$true] %s1902
      %1908 = dma.vmem_to_hbm [thread:$0]  %s1903, 2048, %s3, [#allocation3], 512, 512, 32
    $region17: #{tpu_custom_call.1} parent=1 // pred_fallthru
      _
    // Predicated region
    $region18: #{tpu_custom_call.1} parent=1 // pred_check
      _
    $region19: #{tpu_custom_call.1} parent=1 // pred_check_branch
      %1910 = sbr.rel (0) target = $region21
    $region20: #{tpu_custom_call.1} parent=1 // pred_region
      %1911 = dma.done [#allocation3], 2048
    $region21: #{tpu_custom_call.1} parent=1 // pred_fallthru
      _
    %1912 = vsyncpa [#allocation3], 1

</llo_original>
